<compile_context>
chip_gen: v6e
topology: v6e:2x2x1
jax: 0.10.0
libtpu: 0.0.40
codegen_flags: <defaults>
</compile_context>

<pallas_src>
import numpy as np
import jax
import jax.numpy as jnp
from jax import lax
from jax.experimental import pallas as pl
from jax.experimental.pallas import tpu as pltpu


# ----------------------------------------------------------------------------
# Index-map construction (host-side, compile-time constants)
# ----------------------------------------------------------------------------
def _nearest_src_index(dst_idx, scale_inv, input_size):
    """PyTorch 'nearest' source index: min(floor(dst * scale_inv), input_size - 1)."""
    src = np.floor(dst_idx.astype(np.float64) * scale_inv).astype(np.int64)
    return np.minimum(src, input_size - 1)


def _composed_index_map(size, ratio):
    """Index map of interpolate(scale_factor=ratio) followed by interpolate(size=size)."""
    mid_size = int(np.floor(size * ratio))
    if mid_size < 1:
        # Mirror PyTorch, which errors out on an empty intermediate tensor.
        raise ValueError(
            f"Resize ratio {ratio} gives an empty intermediate size for input size {size}."
        )
    dst = np.arange(size)
    # second resize (target size given) -> scale_inv = mid_size / size
    src_mid = _nearest_src_index(dst, mid_size / size, mid_size)
    # first resize (scale_factor given) -> scale_inv = 1 / ratio
    # TODO(synk): PyTorch with recompute_scale_factor may use mid_size/size here;
    # the two differ only exactly at floor boundaries.
    src_orig = _nearest_src_index(src_mid, 1.0 / ratio, size)
    return src_orig.astype(np.int32)


def _round_up(a, m):
    return ((a + m - 1) // m) * m


def _cdiv(a, b):
    return -(-a // b)


# ----------------------------------------------------------------------------
# Generation-aware sizing knobs
# ----------------------------------------------------------------------------
def _tpu_knobs():
    vmem_bytes = 128 << 20
    try:
        vmem_bytes = int(pltpu.get_tpu_info().vmem_capacity_bytes)
    except Exception:
        pass
    kind = ""
    try:
        kind = str(jax.devices()[0].device_kind).lower()
    except Exception:
        pass
    small_vmem = vmem_bytes <= (80 << 20)                 # v7x-like (64 MiB / TC)
    is_v5e = ("v5" in kind) and (("lite" in kind) or ("5e" in kind))
    # Roofline crossover (bf16) of the fused (B,P)@(P,P) gather vs the
    # separable R@X@CT formulation: 2P vs 2(H+W) flops per output element.
    if is_v5e:
        flat_p_max = 512
    elif small_vmem or ("v7" in kind):
        flat_p_max = 640
    else:                                                 # v6e / unknown
        flat_p_max = 1280
    vmem_cap = (48 << 20) if small_vmem else (100 << 20)  # never request all of VMEM
    block_budget = (2 << 20) if small_vmem else (6 << 20)
    lane_mult = 128 if is_v5e else 256                    # MXU N-dim width
    return flat_p_max, vmem_cap, block_budget, lane_mult


# ----------------------------------------------------------------------------
# Flat path: (B, P) @ (P, P_pad) one-hot gather, selector built in-kernel
# ----------------------------------------------------------------------------
def _resize_flat(x, row_map, col_map, compute_dtype, knobs):
    N, C, H, W = x.shape
    _, vmem_cap, block_budget, lane_mult = knobs
    M, P = N * C, H * W
    itemsize = np.dtype(compute_dtype).itemsize
    P_pad = _round_up(P, lane_mult)   # lane-dense stores, full MXU N passes

    # Flat gather map: out[:, i*W + j] = x[:, row_map[i]*W + col_map[j]]
    fm = (row_map.astype(np.int64)[:, None] * W + col_map[None, :]).reshape(-1)
    fm_np = np.zeros((1, P_pad), dtype=np.int32)
    fm_np[0, :P] = fm                 # padded tail gathers column 0 (sliced off later)
    flat_map = jnp.asarray(fm_np)

    # Rows per grid step: sublane-packing-aware multiple (16 for bf16), sized
    # from a generation-aware VMEM budget, preferring >= 2 grid steps when
    # there is enough work so block i+1's DMA overlaps block i's matmul.
    sub = 16 if compute_dtype == jnp.bfloat16 else 8
    bytes_per_row = (P + P_pad) * itemsize
    rows_cap = max(sub, (block_budget // max(1, bytes_per_row)) // sub * sub)
    B = min(rows_cap, M)
    if M >= 2 * sub:
        B = min(B, _round_up((M + 1) // 2, sub))
    if B < M:
        B = max(sub, (B // sub) * sub)   # partial tail block handled by masking
    grid = _cdiv(M, B)

    x_flat = x.reshape(M, P)             # contiguous reshape: no HBM copy, no pad
    precision = lax.Precision.HIGHEST if compute_dtype == jnp.float32 else None

    sel_bytes = P * P_pad * itemsize     # single-buffered scratch (not an input!)
    needed = sel_bytes + 2 * B * bytes_per_row + 2 * P_pad * 4 + (4 << 20)
    vmem_limit = int(min(vmem_cap, max(32 << 20, needed)))

    def kernel(fm_ref, x_ref, o_ref, sel_ref):
        # Build the one-hot gather selector once; the scratch persists across
        # grid steps.  NOTE: the grid axis is "arbitrary" (not "parallel")
        # precisely because of this step-0 init — per-core scratch under
        # megacore sharding would leave the second core's selector garbage.
        @pl.when(pl.program_id(0) == 0)
        def _():
            k = lax.broadcasted_iota(jnp.int32, sel_ref.shape, 0)
            sel_ref[...] = (k == fm_ref[...]).astype(sel_ref.dtype)

        o_ref[...] = jnp.dot(
            x_ref[...].astype(sel_ref.dtype), sel_ref[...],
            precision=precision, preferred_element_type=jnp.float32,
        ).astype(o_ref.dtype)

    out_flat = pl.pallas_call(
        kernel,
        out_shape=jax.ShapeDtypeStruct((M, P_pad), x.dtype),
        grid_spec=pltpu.PrefetchScalarGridSpec(
            num_scalar_prefetch=0,
            grid=(grid,),
            in_specs=[
                pl.BlockSpec((1, P_pad), lambda i: (0, 0)),   # gather map (tiny)
                pl.BlockSpec((B, P), lambda i: (i, 0)),       # flattened images
            ],
            out_specs=pl.BlockSpec((B, P_pad), lambda i: (i, 0)),
            scratch_shapes=[pltpu.VMEM((P, P_pad), compute_dtype)],
        ),
        compiler_params=pltpu.CompilerParams(
            dimension_semantics=("arbitrary",),
            vmem_limit_bytes=vmem_limit,
        ),
    )(flat_map, x_flat)

    if P_pad != P:
        out_flat = out_flat[:, :P]
    return out_flat.reshape(N, C, H, W)


# ----------------------------------------------------------------------------
# Tiled fallback: batched per-image R @ X @ C^T (identity gathers skipped)
# ----------------------------------------------------------------------------
def _resize_tiled(x, row_map, col_map, rows_id, cols_id, compute_dtype, knobs):
    N, C, H, W = x.shape
    _, vmem_cap, block_budget, _ = knobs
    M = N * C
    itemsize = np.dtype(compute_dtype).itemsize
    io_itemsize = np.dtype(x.dtype).itemsize

    use_rows = not rows_id
    use_cols = not cols_id
    precision = lax.Precision.HIGHEST if compute_dtype == jnp.float32 else None

    # W-tiling (lane-dense multiples of 128) for very wide images relieves the
    # output-block / column-selector VMEM pressure (matters on v7x 64 MiB VMEM).
    # When both gathers are active, R @ X is recomputed per W tile — acceptable
    # since nw > 1 only for W > 1024.
    tw = W if W <= 1024 else 512
    nw = _cdiv(W, tw)

    x_tiled_w = use_rows and not use_cols          # cols identity -> X tiled like out
    x_block_w = tw if x_tiled_w else W

    per_img = (H * x_block_w + H * tw) * io_itemsize
    budget = max(block_budget, 3 << 20)
    B = max(1, min(M, budget // max(1, per_img)))
    if M >= 2:
        B = min(B, _cdiv(M, 2))                    # >= 2 grid steps along images

    sel_bytes = (H * H * itemsize if use_rows else 0) + (W * tw * itemsize if use_cols else 0)
    tmp_bytes = H * W * itemsize if (use_rows and use_cols) else 0

    def vmem_needed(b):
        return 2 * sel_bytes + 2 * b * per_img + tmp_bytes + (4 << 20)

    while B > 1 and vmem_needed(B) > vmem_cap:
        B = max(1, B // 2)
    vmem_limit = int(min(vmem_cap, max(32 << 20, vmem_needed(B))))
    nm = _cdiv(M, B)

    operands = []
    in_specs = []

    if use_rows:
        r_np = np.zeros((H, H), dtype=np.float32)
        r_np[np.arange(H), row_map] = 1.0
        operands.append(jnp.asarray(r_np, dtype=compute_dtype))
        in_specs.append(pl.BlockSpec((H, H), lambda i, j: (0, 0)))

    operands.append(x.reshape(M, H, W))            # original dtype; cast in kernel
    if x_tiled_w:
        in_specs.append(pl.BlockSpec((B, H, tw), lambda i, j: (i, 0, j)))
    else:
        in_specs.append(pl.BlockSpec((B, H, W), lambda i, j: (i, 0, 0)))

    if use_cols:
        ct_np = np.zeros((W, W), dtype=np.float32)
        ct_np[col_map, np.arange(W)] = 1.0
        operands.append(jnp.asarray(ct_np, dtype=compute_dtype))
        in_specs.append(pl.BlockSpec((W, tw), lambda i, j: (0, j)))

    scratch_shapes = []
    if use_rows and use_cols:
        scratch_shapes.append(pltpu.VMEM((H, W), compute_dtype))

    cdtype = compute_dtype

    def kernel(*refs):
        idx = 0
        r_ref = None
        ct_ref = None
        if use_rows:
            r_ref = refs[idx]; idx += 1
        x_ref = refs[idx]; idx += 1
        if use_cols:
            ct_ref = refs[idx]; idx += 1
        o_ref = refs[idx]; idx += 1
        tmp_ref = refs[idx] if (use_rows and use_cols) else None

        # fori_loop (not a static unroll) bounds vreg live ranges per image.
        def body(b, carry):
            img = x_ref[b].astype(cdtype)
            if use_rows and use_cols:
                tmp_ref[...] = jnp.dot(
                    r_ref[...], img, precision=precision,
                    preferred_element_type=jnp.float32).astype(cdtype)
                res = jnp.dot(tmp_ref[...], ct_ref[...], precision=precision,
                              preferred_element_type=jnp.float32)
            elif use_rows:
                res = jnp.dot(r_ref[...], img, precision=precision,
                              preferred_element_type=jnp.float32)
            else:
                res = jnp.dot(img, ct_ref[...], precision=precision,
                              preferred_element_type=jnp.float32)
            o_ref[b] = res.astype(o_ref.dtype)
            return carry

        lax.fori_loop(0, B, body, 0)

    out = pl.pallas_call(
        kernel,
        out_shape=jax.ShapeDtypeStruct((M, H, W), x.dtype),
        grid_spec=pltpu.PrefetchScalarGridSpec(
            num_scalar_prefetch=0,
            grid=(nm, nw),
            in_specs=in_specs,
            out_specs=pl.BlockSpec((B, H, tw), lambda i, j: (i, 0, j)),
            scratch_shapes=scratch_shapes,
        ),
        compiler_params=pltpu.CompilerParams(
            dimension_semantics=("parallel", "arbitrary"),
            vmem_limit_bytes=vmem_limit,
        ),
    )(*operands)

    return out.reshape(N, C, H, W)


# ----------------------------------------------------------------------------
# Public entry point
# ----------------------------------------------------------------------------
def resize_forward(x, ratio):
    """x: (N, C, H, W). Returns (N, C, H, W) with Resize(ratio).forward semantics."""
    N, C, H, W = x.shape
    row_map = _composed_index_map(H, ratio)   # (H,) int32, compile-time constant
    col_map = _composed_index_map(W, ratio)   # (W,) int32, compile-time constant

    rows_id = bool(np.array_equal(row_map, np.arange(H)))
    cols_id = bool(np.array_equal(col_map, np.arange(W)))
    if rows_id and cols_id:
        # Degenerate ratio: the composed resize maps every pixel to itself.
        return x

    if x.dtype in (jnp.float32, jnp.bfloat16):
        compute_dtype = x.dtype
    else:
        compute_dtype = jnp.float32  # TODO(synk): non-f32/bf16 inputs gathered through f32

    knobs = _tpu_knobs()
    flat_p_max, vmem_cap, _, _ = knobs
    P = H * W
    # f32 matmuls are multi-pass on the MXU (~3x bf16) -> derate the crossover.
    p_max = flat_p_max if compute_dtype == jnp.bfloat16 else flat_p_max // 2
    sel_fits = P * _round_up(P, 256) * np.dtype(compute_dtype).itemsize <= vmem_cap // 4
    if P <= p_max and sel_fits:
        return _resize_flat(x, row_map, col_map, compute_dtype, knobs)
    return _resize_tiled(x, row_map, col_map, rows_id, cols_id, compute_dtype, knobs)


# ----------------------------------------------------------------------------
# Self-test
# ----------------------------------------------------------------------------
def _reference(x, ratio):
    _, _, H, W = x.shape
    rm = jnp.asarray(_composed_index_map(H, ratio))
    cm = jnp.asarray(_composed_index_map(W, ratio))
    return x[:, :, rm, :][:, :, :, cm]


if __name__ == "__main__":
    key = jax.random.PRNGKey(0)

    # 1) Main case (flat path, P = 256 = lane multiple).
    N, C, H, W = 2, 4, 16, 16
    ratio = 0.5
    x = jax.random.normal(key, (N, C, H, W), dtype=jnp.float32)
    out = jax.block_until_ready(resize_forward(x, ratio))
    np.testing.assert_allclose(np.asarray(out), np.asarray(_reference(x, ratio)),
                               rtol=1e-6, atol=1e-6)
    assert out.shape == (N, C, H, W) and out.dtype == x.dtype

    # 2) Flat path with P (=144) not a multiple of 128: exercises the padded
    #    lane-dense output + wrapper slice.
    x2 = jax.random.normal(jax.random.PRNGKey(1), (2, 3, 12, 12), dtype=jnp.float32)
    out2 = jax.block_until_ready(resize_forward(x2, 1.3))
    np.testing.assert_allclose(np.asarray(out2), np.asarray(_reference(x2, 1.3)),
                               rtol=1e-6, atol=1e-6)

    # 3) Larger image (P = 3136 > roofline crossover): exercises the tiled
    #    separable R @ X @ C^T fallback.
    x3 = jax.random.normal(jax.random.PRNGKey(2), (1, 2, 56, 56), dtype=jnp.float32)
    out3 = jax.block_until_ready(resize_forward(x3, 0.7))
    np.testing.assert_allclose(np.asarray(out3), np.asarray(_reference(x3, 0.7)),
                               rtol=1e-6, atol=1e-6)

    print("KERNEL_OK")
</pallas_src>

<mosaic_0001>
module attributes {stable_mosaic.version = 11 : i64} {
  func.func @kernel(%arg0: i32, %arg1: memref<1x256xi32, #tpu.memory_space<vmem>>, %arg2: memref<8x256xf32, #tpu.memory_space<vmem>>, %arg3: memref<8x256xf32, #tpu.memory_space<vmem>>, %arg4: memref<256x256xf32, #tpu.memory_space<vmem>>) attributes {dimension_semantics = [#tpu.dimension_semantics<arbitrary>], iteration_bounds = array<i64: 1>, scalar_prefetch = 0 : i64, scratch_operands = 1 : i64, tpu.core_type = #tpu.core_type<tc>, window_params = [{pipeline_mode = #tpu.pipeline_mode<synchronous>, transform_indices = @transform_0, window_bounds = array<i64: 1, 256>}, {transform_indices = @transform_1, window_bounds = array<i64: 8, 256>}, {transform_indices = @transform_2, window_bounds = array<i64: 8, 256>}]} {
    %c0_i32 = arith.constant 0 : i32
    %0 = arith.cmpi eq, %arg0, %c0_i32 : i32
    %1 = arith.extui %0 : i1 to i32
    %c0_i32_0 = arith.constant 0 : i32
    %2 = arith.cmpi ne, %1, %c0_i32_0 : i32
    scf.if %2 {
      %7 = tpu.iota {dimensions = array<i32: 0>} : vector<256x256xi32>
      %c0_6 = arith.constant 0 : index
      %c0_7 = arith.constant 0 : index
      %8 = vector.load %arg1[%c0_6, %c0_7] : memref<1x256xi32, #tpu.memory_space<vmem>>, vector<1x256xi32>
      %9 = vector.broadcast %8 : vector<1x256xi32> to vector<256x256xi32>
      %10 = arith.cmpi eq, %7, %9 : vector<256x256xi32>
      %11 = arith.extui %10 : vector<256x256xi1> to vector<256x256xi32>
      %12 = arith.sitofp %11 : vector<256x256xi32> to vector<256x256xf32>
      %c0_8 = arith.constant 0 : index
      %c0_9 = arith.constant 0 : index
      %13 = vector.load %arg4[%c0_8, %c0_9] : memref<256x256xf32, #tpu.memory_space<vmem>>, vector<256x256xf32>
      tpu.vector_store %arg4[%c0_8, %c0_9], %12 {strides = array<i32>} : memref<256x256xf32, #tpu.memory_space<vmem>>, vector<256x256xf32>,
    } else {
    }
    %c0 = arith.constant 0 : index
    %c0_1 = arith.constant 0 : index
    %3 = vector.load %arg2[%c0, %c0_1] : memref<8x256xf32, #tpu.memory_space<vmem>>, vector<8x256xf32>
    %c0_2 = arith.constant 0 : index
    %c0_3 = arith.constant 0 : index
    %4 = vector.load %arg4[%c0_2, %c0_3] : memref<256x256xf32, #tpu.memory_space<vmem>>, vector<256x256xf32>
    %cst = arith.constant dense<0.000000e+00> : vector<8x256xf32>
    %5 = tpu.matmul %3, %4, %cst {dimension_numbers = #tpu.dot_dimension_numbers<[1], [0], [0], [1], [0, 0, 1, 1], [], []>, precision = #tpu.contract_precision<fp32>} : vector<8x256xf32>, vector<256x256xf32>, vector<8x256xf32> -> vector<8x256xf32>
    %c0_4 = arith.constant 0 : index
    %c0_5 = arith.constant 0 : index
    %6 = vector.load %arg3[%c0_4, %c0_5] : memref<8x256xf32, #tpu.memory_space<vmem>>, vector<8x256xf32>
    tpu.vector_store %arg3[%c0_4, %c0_5], %5 {strides = array<i32>} : memref<8x256xf32, #tpu.memory_space<vmem>>, vector<8x256xf32>,
    return
  }
  func.func @transform_0(%arg0: i32) -> (i32, i32) {
    %c0_i32 = arith.constant 0 : i32
    %c0_i32_0 = arith.constant 0 : i32
    %c0_i32_1 = arith.constant 0 : i32
    return %c0_i32, %c0_i32_0 : i32, i32
  }
  func.func @transform_1(%arg0: i32) -> (i32, i32) {
    %c0_i32 = arith.constant 0 : i32
    %c0_i32_0 = arith.constant 0 : i32
    return %arg0, %c0_i32 : i32, i32
  }
  func.func @transform_2(%arg0: i32) -> (i32, i32) {
    %c0_i32 = arith.constant 0 : i32
    %c0_i32_0 = arith.constant 0 : i32
    return %arg0, %c0_i32 : i32, i32
  }
}

</mosaic_0001>

<llo_original>
// kernel: tpu_custom_call.1
$region0: #{tpu_custom_call.1}
  #allocation0 [shape = 'u32[]', space=smem, size = 0x4, offset = 0x4, fixed_abs, tag = 'smem constant byte address 0x4 - core index']
  #allocation1 [shape = 'u32[144,128]{1,0:T(1,128)}', space=vmem, size = 0x12000, scoped, tag = 'internal scratch']
  #allocation2 [shape = 'f32[256,256]{1,0:T(8,128)}', space=vmem, size = 0x40000, scoped, tag = 'scratch operand']
  %s0 = inlined_call_operand.hbm [shape: s32[1,256], index: 0, kind: input, shape index: {}]
  %s1 = inlined_call_operand.hbm [shape: f32[8,256], index: 1, kind: input, shape index: {}]
  %s2 = inlined_call_operand.hbm [shape: f32[8,256], index: 2, kind: output, shape index: {}]
  %s3 = sld [smem:[#allocation0]]
  $region30: #{tpu_custom_call.1} parent=0
    _
  %s5 = ssub.s32 1, %s3
  %s6 = scalar_select 0, %s5, %s3
  $region1: #{tpu_custom_call.1} parent=0
    #allocation3 [shape = 'u8[1024]{0}', space=vmem, size = 0x400, scoped, tag = 'input window, operand 0, single buffered']
    #allocation4 [shape = 's32[1]{0}', space=sflag, size = 0x4, scoped, tag = 'scoped memory for tpu_custom_call.1']
    #allocation5 [shape = 's32[1]{0}', space=sflag, size = 0x4, scoped, tag = 'scoped memory for tpu_custom_call.1']
    #allocation6 [shape = 'u8[8192]{0}', space=vmem, size = 0x2000, scoped, tag = 'input window, operand 1, single buffered']
    #allocation7 [shape = 's32[1]{0}', space=sflag, size = 0x4, scoped, tag = 'scoped memory for tpu_custom_call.1']
    #allocation8 [shape = 'u8[8192]{0}', space=vmem, size = 0x2000, scoped, tag = 'output window, operand 0, single buffered']
    %7 = vsyncpa [#allocation4], 0
    %8 = vsyncpa [#allocation7], 0
    %9 = vsyncpa [#allocation5], 0
    // Predicated region
    $region2: #{tpu_custom_call.1} parent=1 // pred_check
      _
    $region3: #{tpu_custom_call.1} parent=1 // pred_check_branch
      %11 = sbr.rel (0) target = $region5
    $region4: #{tpu_custom_call.1} parent=1 // pred_region
      %s13 = ssub.s32 32, 32
      %14 = vsyncadd [#allocation4], %s13
      %s16 = sshll.u32 [#allocation3], 4
      %s17 = int_to_ptr.vmem [resolvable:$true] %s16
      %19 = dma.hbm_to_vmem [thread:$0]  %s0, 32, %s17, [#allocation4]
    $region5: #{tpu_custom_call.1} parent=1 // pred_fallthru
      _
    // Predicated region
    $region6: #{tpu_custom_call.1} parent=1 // pred_check
      _
    $region7: #{tpu_custom_call.1} parent=1 // pred_check_branch
      %21 = sbr.rel (0) target = $region9
    $region8: #{tpu_custom_call.1} parent=1 // pred_region
      %s23 = ssub.s32 256, 256
      %24 = vsyncadd [#allocation7], %s23
      %s26 = sshll.u32 [#allocation6], 4
      %s27 = int_to_ptr.vmem [resolvable:$true] %s26
      %29 = dma.hbm_to_vmem [thread:$0]  %s1, 256, %s27, [#allocation7]
    $region9: #{tpu_custom_call.1} parent=1 // pred_fallthru
      _
    // Predicated region
    $region10: #{tpu_custom_call.1} parent=1 // pred_check
      _
    $region11: #{tpu_custom_call.1} parent=1 // pred_check_branch
      %31 = sbr.rel (0) target = $region13
    $region12: #{tpu_custom_call.1} parent=1 // pred_region
      %32 = dma.done [#allocation4], 32
    $region13: #{tpu_custom_call.1} parent=1 // pred_fallthru
      _
    // Predicated region
    $region14: #{tpu_custom_call.1} parent=1 // pred_check
      _
    $region15: #{tpu_custom_call.1} parent=1 // pred_check_branch
      %34 = sbr.rel (0) target = $region17
    $region16: #{tpu_custom_call.1} parent=1 // pred_region
      %35 = dma.done [#allocation7], 256
    $region17: #{tpu_custom_call.1} parent=1 // pred_fallthru
      _
    %p36 = scmp.eq.s32.totalorder 0, 0
    // Predicated region
    $region18: #{tpu_custom_call.1} parent=1 // pred_check
      %p37 = pneg %p36
    $region19: #{tpu_custom_call.1} parent=1 // pred_check_branch
      %39 = sbr.rel (%p37) target = $region21
    $region20: #{tpu_custom_call.1} parent=1 // pred_region
      %v40 = vlaneseq
      %v41 = vshrl.u32 %v40, 7
      %v42 = vadd.s32 %v41, 8
      %v43 = vadd.s32 %v41, 16
      %v44 = vadd.s32 %v41, 24
      %v45 = vadd.s32 %v41, 32
      %v46 = vadd.s32 %v41, 40
      %v47 = vadd.s32 %v41, 48
      %v48 = vadd.s32 %v41, 56
      %v49 = vadd.s32 %v41, 64
      %v50 = vadd.s32 %v41, 72
      %v51 = vadd.s32 %v41, 80
      %v52 = vadd.s32 %v41, 88
      %v53 = vadd.s32 %v41, 96
      %v54 = vadd.s32 %v41, 104
      %v55 = vadd.s32 %v41, 112
      %v56 = vadd.s32 %v41, 120
      %v57 = vadd.s32 %v41, 128
      %v58 = vadd.s32 %v41, 136
      %v59 = vadd.s32 %v41, 144
      %v60 = vadd.s32 %v41, 152
      %v61 = vadd.s32 %v41, 160
      %v62 = vadd.s32 %v41, 168
      %v63 = vadd.s32 %v41, 176
      %v64 = vadd.s32 %v41, 184
      %v65 = vadd.s32 %v41, 192
      %v66 = vadd.s32 %v41, 200
      %v67 = vadd.s32 %v41, 208
      %v68 = vadd.s32 %v41, 216
      %v69 = vadd.s32 %v41, 224
      %v70 = vadd.s32 %v41, 232
      %v71 = vadd.s32 %v41, 240
      %v72 = vadd.s32 %v41, 248
      %v73 = vld [vmem:[#allocation3] sm:$0x3]
      %v74 = vlaneseq
      %v75 = vshrl.u32 %v74, 7
      %v76 = vsub.s32 0, %v75
      %v77 = vrot.slane %v73, %v76
      %v78 = vlaneseq
      %v79 = vshrl.u32 %v78, 7
      %v80 = vsub.s32 1, %v79
      %v81 = vrot.slane %v73, %v80
      %vm82 = vcmp.eq.s32.totalorder %v41, %v77
      %vm83 = vcmp.eq.s32.totalorder %v41, %v81
      %vm84 = vcmp.eq.s32.totalorder %v42, %v77
      %vm85 = vcmp.eq.s32.totalorder %v42, %v81
      %vm86 = vcmp.eq.s32.totalorder %v43, %v77
      %vm87 = vcmp.eq.s32.totalorder %v43, %v81
      %vm88 = vcmp.eq.s32.totalorder %v44, %v77
      %vm89 = vcmp.eq.s32.totalorder %v44, %v81
      %vm90 = vcmp.eq.s32.totalorder %v45, %v77
      %vm91 = vcmp.eq.s32.totalorder %v45, %v81
      %vm92 = vcmp.eq.s32.totalorder %v46, %v77
      %vm93 = vcmp.eq.s32.totalorder %v46, %v81
      %vm94 = vcmp.eq.s32.totalorder %v47, %v77
      %vm95 = vcmp.eq.s32.totalorder %v47, %v81
      %vm96 = vcmp.eq.s32.totalorder %v48, %v77
      %vm97 = vcmp.eq.s32.totalorder %v48, %v81
      %vm98 = vcmp.eq.s32.totalorder %v49, %v77
      %vm99 = vcmp.eq.s32.totalorder %v49, %v81
      %vm100 = vcmp.eq.s32.totalorder %v50, %v77
      %vm101 = vcmp.eq.s32.totalorder %v50, %v81
      %vm102 = vcmp.eq.s32.totalorder %v51, %v77
      %vm103 = vcmp.eq.s32.totalorder %v51, %v81
      %vm104 = vcmp.eq.s32.totalorder %v52, %v77
      %vm105 = vcmp.eq.s32.totalorder %v52, %v81
      %vm106 = vcmp.eq.s32.totalorder %v53, %v77
      %vm107 = vcmp.eq.s32.totalorder %v53, %v81
      %vm108 = vcmp.eq.s32.totalorder %v54, %v77
      %vm109 = vcmp.eq.s32.totalorder %v54, %v81
      %vm110 = vcmp.eq.s32.totalorder %v55, %v77
      %vm111 = vcmp.eq.s32.totalorder %v55, %v81
      %vm112 = vcmp.eq.s32.totalorder %v56, %v77
      %vm113 = vcmp.eq.s32.totalorder %v56, %v81
      %vm114 = vcmp.eq.s32.totalorder %v57, %v77
      %vm115 = vcmp.eq.s32.totalorder %v57, %v81
      %vm116 = vcmp.eq.s32.totalorder %v58, %v77
      %vm117 = vcmp.eq.s32.totalorder %v58, %v81
      %vm118 = vcmp.eq.s32.totalorder %v59, %v77
      %vm119 = vcmp.eq.s32.totalorder %v59, %v81
      %vm120 = vcmp.eq.s32.totalorder %v60, %v77
      %vm121 = vcmp.eq.s32.totalorder %v60, %v81
      %vm122 = vcmp.eq.s32.totalorder %v61, %v77
      %vm123 = vcmp.eq.s32.totalorder %v61, %v81
      %vm124 = vcmp.eq.s32.totalorder %v62, %v77
      %vm125 = vcmp.eq.s32.totalorder %v62, %v81
      %vm126 = vcmp.eq.s32.totalorder %v63, %v77
      %vm127 = vcmp.eq.s32.totalorder %v63, %v81
      %vm128 = vcmp.eq.s32.totalorder %v64, %v77
      %vm129 = vcmp.eq.s32.totalorder %v64, %v81
      %vm130 = vcmp.eq.s32.totalorder %v65, %v77
      %vm131 = vcmp.eq.s32.totalorder %v65, %v81
      %vm132 = vcmp.eq.s32.totalorder %v66, %v77
      %vm133 = vcmp.eq.s32.totalorder %v66, %v81
      %vm134 = vcmp.eq.s32.totalorder %v67, %v77
      %vm135 = vcmp.eq.s32.totalorder %v67, %v81
      %vm136 = vcmp.eq.s32.totalorder %v68, %v77
      %vm137 = vcmp.eq.s32.totalorder %v68, %v81
      %vm138 = vcmp.eq.s32.totalorder %v69, %v77
      %vm139 = vcmp.eq.s32.totalorder %v69, %v81
      %vm140 = vcmp.eq.s32.totalorder %v70, %v77
      %vm141 = vcmp.eq.s32.totalorder %v70, %v81
      %vm142 = vcmp.eq.s32.totalorder %v71, %v77
      %vm143 = vcmp.eq.s32.totalorder %v71, %v81
      %vm144 = vcmp.eq.s32.totalorder %v72, %v77
      %vm145 = vcmp.eq.s32.totalorder %v72, %v81
      %v146 = vsel %vm82, 1, 0
      %v147 = vsel %vm83, 1, 0
      %v148 = vsel %vm84, 1, 0
      %v149 = vsel %vm85, 1, 0
      %v150 = vsel %vm86, 1, 0
      %v151 = vsel %vm87, 1, 0
      %v152 = vsel %vm88, 1, 0
      %v153 = vsel %vm89, 1, 0
      %v154 = vsel %vm90, 1, 0
      %v155 = vsel %vm91, 1, 0
      %v156 = vsel %vm92, 1, 0
      %v157 = vsel %vm93, 1, 0
      %v158 = vsel %vm94, 1, 0
      %v159 = vsel %vm95, 1, 0
      %v160 = vsel %vm96, 1, 0
      %v161 = vsel %vm97, 1, 0
      %v162 = vsel %vm98, 1, 0
      %v163 = vsel %vm99, 1, 0
      %v164 = vsel %vm100, 1, 0
      %v165 = vsel %vm101, 1, 0
      %v166 = vsel %vm102, 1, 0
      %v167 = vsel %vm103, 1, 0
      %v168 = vsel %vm104, 1, 0
      %v169 = vsel %vm105, 1, 0
      %v170 = vsel %vm106, 1, 0
      %v171 = vsel %vm107, 1, 0
      %v172 = vsel %vm108, 1, 0
      %v173 = vsel %vm109, 1, 0
      %v174 = vsel %vm110, 1, 0
      %v175 = vsel %vm111, 1, 0
      %v176 = vsel %vm112, 1, 0
      %v177 = vsel %vm113, 1, 0
      %v178 = vsel %vm114, 1, 0
      %v179 = vsel %vm115, 1, 0
      %v180 = vsel %vm116, 1, 0
      %v181 = vsel %vm117, 1, 0
      %v182 = vsel %vm118, 1, 0
      %v183 = vsel %vm119, 1, 0
      %v184 = vsel %vm120, 1, 0
      %v185 = vsel %vm121, 1, 0
      %v186 = vsel %vm122, 1, 0
      %v187 = vsel %vm123, 1, 0
      %v188 = vsel %vm124, 1, 0
      %v189 = vsel %vm125, 1, 0
      %v190 = vsel %vm126, 1, 0
      %v191 = vsel %vm127, 1, 0
      %v192 = vsel %vm128, 1, 0
      %v193 = vsel %vm129, 1, 0
      %v194 = vsel %vm130, 1, 0
      %v195 = vsel %vm131, 1, 0
      %v196 = vsel %vm132, 1, 0
      %v197 = vsel %vm133, 1, 0
      %v198 = vsel %vm134, 1, 0
      %v199 = vsel %vm135, 1, 0
      %v200 = vsel %vm136, 1, 0
      %v201 = vsel %vm137, 1, 0
      %v202 = vsel %vm138, 1, 0
      %v203 = vsel %vm139, 1, 0
      %v204 = vsel %vm140, 1, 0
      %v205 = vsel %vm141, 1, 0
      %v206 = vsel %vm142, 1, 0
      %v207 = vsel %vm143, 1, 0
      %v208 = vsel %vm144, 1, 0
      %v209 = vsel %vm145, 1, 0
      %v210 = vcvt.s32.f32 %v146
      %v211 = vcvt.s32.f32 %v147
      %v212 = vcvt.s32.f32 %v148
      %v213 = vcvt.s32.f32 %v149
      %v214 = vcvt.s32.f32 %v150
      %v215 = vcvt.s32.f32 %v151
      %v216 = vcvt.s32.f32 %v152
      %v217 = vcvt.s32.f32 %v153
      %v218 = vcvt.s32.f32 %v154
      %v219 = vcvt.s32.f32 %v155
      %v220 = vcvt.s32.f32 %v156
      %v221 = vcvt.s32.f32 %v157
      %v222 = vcvt.s32.f32 %v158
      %v223 = vcvt.s32.f32 %v159
      %v224 = vcvt.s32.f32 %v160
      %v225 = vcvt.s32.f32 %v161
      %v226 = vcvt.s32.f32 %v162
      %v227 = vcvt.s32.f32 %v163
      %v228 = vcvt.s32.f32 %v164
      %v229 = vcvt.s32.f32 %v165
      %v230 = vcvt.s32.f32 %v166
      %v231 = vcvt.s32.f32 %v167
      %v232 = vcvt.s32.f32 %v168
      %v233 = vcvt.s32.f32 %v169
      %v234 = vcvt.s32.f32 %v170
      %v235 = vcvt.s32.f32 %v171
      %v236 = vcvt.s32.f32 %v172
      %v237 = vcvt.s32.f32 %v173
      %v238 = vcvt.s32.f32 %v174
      %v239 = vcvt.s32.f32 %v175
      %v240 = vcvt.s32.f32 %v176
      %v241 = vcvt.s32.f32 %v177
      %v242 = vcvt.s32.f32 %v178
      %v243 = vcvt.s32.f32 %v179
      %v244 = vcvt.s32.f32 %v180
      %v245 = vcvt.s32.f32 %v181
      %v246 = vcvt.s32.f32 %v182
      %v247 = vcvt.s32.f32 %v183
      %v248 = vcvt.s32.f32 %v184
      %v249 = vcvt.s32.f32 %v185
      %v250 = vcvt.s32.f32 %v186
      %v251 = vcvt.s32.f32 %v187
      %v252 = vcvt.s32.f32 %v188
      %v253 = vcvt.s32.f32 %v189
      %v254 = vcvt.s32.f32 %v190
      %v255 = vcvt.s32.f32 %v191
      %v256 = vcvt.s32.f32 %v192
      %v257 = vcvt.s32.f32 %v193
      %v258 = vcvt.s32.f32 %v194
      %v259 = vcvt.s32.f32 %v195
      %v260 = vcvt.s32.f32 %v196
      %v261 = vcvt.s32.f32 %v197
      %v262 = vcvt.s32.f32 %v198
      %v263 = vcvt.s32.f32 %v199
      %v264 = vcvt.s32.f32 %v200
      %v265 = vcvt.s32.f32 %v201
      %v266 = vcvt.s32.f32 %v202
      %v267 = vcvt.s32.f32 %v203
      %v268 = vcvt.s32.f32 %v204
      %v269 = vcvt.s32.f32 %v205
      %v270 = vcvt.s32.f32 %v206
      %v271 = vcvt.s32.f32 %v207
      %v272 = vcvt.s32.f32 %v208
      %v273 = vcvt.s32.f32 %v209
      %274 = vst [vmem:[#allocation2] sm:$0xff] %v210
      %275 = vst [vmem:[#allocation2 + $0x8] sm:$0xff] %v211
      %276 = vst [vmem:[#allocation2 + $0x10] sm:$0xff] %v212
      %277 = vst [vmem:[#allocation2 + $0x18] sm:$0xff] %v213
      %278 = vst [vmem:[#allocation2 + $0x20] sm:$0xff] %v214
      %279 = vst [vmem:[#allocation2 + $0x28] sm:$0xff] %v215
      %280 = vst [vmem:[#allocation2 + $0x30] sm:$0xff] %v216
      %281 = vst [vmem:[#allocation2 + $0x38] sm:$0xff] %v217
      %282 = vst [vmem:[#allocation2 + $0x40] sm:$0xff] %v218
      %283 = vst [vmem:[#allocation2 + $0x48] sm:$0xff] %v219
      %284 = vst [vmem:[#allocation2 + $0x50] sm:$0xff] %v220
      %285 = vst [vmem:[#allocation2 + $0x58] sm:$0xff] %v221
      %286 = vst [vmem:[#allocation2 + $0x60] sm:$0xff] %v222
      %287 = vst [vmem:[#allocation2 + $0x68] sm:$0xff] %v223
      %288 = vst [vmem:[#allocation2 + $0x70] sm:$0xff] %v224
      %289 = vst [vmem:[#allocation2 + $0x78] sm:$0xff] %v225
      %290 = vst [vmem:[#allocation2 + $0x80] sm:$0xff] %v226
      %291 = vst [vmem:[#allocation2 + $0x88] sm:$0xff] %v227
      %292 = vst [vmem:[#allocation2 + $0x90] sm:$0xff] %v228
      %293 = vst [vmem:[#allocation2 + $0x98] sm:$0xff] %v229
      %294 = vst [vmem:[#allocation2 + $0xa0] sm:$0xff] %v230
      %295 = vst [vmem:[#allocation2 + $0xa8] sm:$0xff] %v231
      %296 = vst [vmem:[#allocation2 + $0xb0] sm:$0xff] %v232
      %297 = vst [vmem:[#allocation2 + $0xb8] sm:$0xff] %v233
      %298 = vst [vmem:[#allocation2 + $0xc0] sm:$0xff] %v234
      %299 = vst [vmem:[#allocation2 + $0xc8] sm:$0xff] %v235
      %300 = vst [vmem:[#allocation2 + $0xd0] sm:$0xff] %v236
      %301 = vst [vmem:[#allocation2 + $0xd8] sm:$0xff] %v237
      %302 = vst [vmem:[#allocation2 + $0xe0] sm:$0xff] %v238
      %303 = vst [vmem:[#allocation2 + $0xe8] sm:$0xff] %v239
      %304 = vst [vmem:[#allocation2 + $0xf0] sm:$0xff] %v240
      %305 = vst [vmem:[#allocation2 + $0xf8] sm:$0xff] %v241
      %306 = vst [vmem:[#allocation2 + $0x100] sm:$0xff] %v242
      %307 = vst [vmem:[#allocation2 + $0x108] sm:$0xff] %v243
      %308 = vst [vmem:[#allocation2 + $0x110] sm:$0xff] %v244
      %309 = vst [vmem:[#allocation2 + $0x118] sm:$0xff] %v245
      %310 = vst [vmem:[#allocation2 + $0x120] sm:$0xff] %v246
      %311 = vst [vmem:[#allocation2 + $0x128] sm:$0xff] %v247
      %312 = vst [vmem:[#allocation2 + $0x130] sm:$0xff] %v248
      %313 = vst [vmem:[#allocation2 + $0x138] sm:$0xff] %v249
      %314 = vst [vmem:[#allocation2 + $0x140] sm:$0xff] %v250
      %315 = vst [vmem:[#allocation2 + $0x148] sm:$0xff] %v251
      %316 = vst [vmem:[#allocation2 + $0x150] sm:$0xff] %v252
      %317 = vst [vmem:[#allocation2 + $0x158] sm:$0xff] %v253
      %318 = vst [vmem:[#allocation2 + $0x160] sm:$0xff] %v254
      %319 = vst [vmem:[#allocation2 + $0x168] sm:$0xff] %v255
      %320 = vst [vmem:[#allocation2 + $0x170] sm:$0xff] %v256
      %321 = vst [vmem:[#allocation2 + $0x178] sm:$0xff] %v257
      %322 = vst [vmem:[#allocation2 + $0x180] sm:$0xff] %v258
      %323 = vst [vmem:[#allocation2 + $0x188] sm:$0xff] %v259
      %324 = vst [vmem:[#allocation2 + $0x190] sm:$0xff] %v260
      %325 = vst [vmem:[#allocation2 + $0x198] sm:$0xff] %v261
      %326 = vst [vmem:[#allocation2 + $0x1a0] sm:$0xff] %v262
      %327 = vst [vmem:[#allocation2 + $0x1a8] sm:$0xff] %v263
      %328 = vst [vmem:[#allocation2 + $0x1b0] sm:$0xff] %v264
      %329 = vst [vmem:[#allocation2 + $0x1b8] sm:$0xff] %v265
      %330 = vst [vmem:[#allocation2 + $0x1c0] sm:$0xff] %v266
      %331 = vst [vmem:[#allocation2 + $0x1c8] sm:$0xff] %v267
      %332 = vst [vmem:[#allocation2 + $0x1d0] sm:$0xff] %v268
      %333 = vst [vmem:[#allocation2 + $0x1d8] sm:$0xff] %v269
      %334 = vst [vmem:[#allocation2 + $0x1e0] sm:$0xff] %v270
      %335 = vst [vmem:[#allocation2 + $0x1e8] sm:$0xff] %v271
      %336 = vst [vmem:[#allocation2 + $0x1f0] sm:$0xff] %v272
      %337 = vst [vmem:[#allocation2 + $0x1f8] sm:$0xff] %v273
    $region21: #{tpu_custom_call.1} parent=1 // pred_fallthru
      _
    %v338 = vld [vmem:[#allocation6] sm:$0xff]
    %v339 = vld [vmem:[#allocation6 + $0x8] sm:$0xff]
    %v340 = vld [vmem:[#allocation2] sm:$0xff]
    %v341 = vld [vmem:[#allocation2 + $0x8] sm:$0xff]
    %v342 = vld [vmem:[#allocation2 + $0x10] sm:$0xff]
    %v343 = vld [vmem:[#allocation2 + $0x18] sm:$0xff]
    %v344 = vld [vmem:[#allocation2 + $0x20] sm:$0xff]
    %v345 = vld [vmem:[#allocation2 + $0x28] sm:$0xff]
    %v346 = vld [vmem:[#allocation2 + $0x30] sm:$0xff]
    %v347 = vld [vmem:[#allocation2 + $0x38] sm:$0xff]
    %v348 = vld [vmem:[#allocation2 + $0x40] sm:$0xff]
    %v349 = vld [vmem:[#allocation2 + $0x48] sm:$0xff]
    %v350 = vld [vmem:[#allocation2 + $0x50] sm:$0xff]
    %v351 = vld [vmem:[#allocation2 + $0x58] sm:$0xff]
    %v352 = vld [vmem:[#allocation2 + $0x60] sm:$0xff]
    %v353 = vld [vmem:[#allocation2 + $0x68] sm:$0xff]
    %v354 = vld [vmem:[#allocation2 + $0x70] sm:$0xff]
    %v355 = vld [vmem:[#allocation2 + $0x78] sm:$0xff]
    %v356 = vld [vmem:[#allocation2 + $0x80] sm:$0xff]
    %v357 = vld [vmem:[#allocation2 + $0x88] sm:$0xff]
    %v358 = vld [vmem:[#allocation2 + $0x90] sm:$0xff]
    %v359 = vld [vmem:[#allocation2 + $0x98] sm:$0xff]
    %v360 = vld [vmem:[#allocation2 + $0xa0] sm:$0xff]
    %v361 = vld [vmem:[#allocation2 + $0xa8] sm:$0xff]
    %v362 = vld [vmem:[#allocation2 + $0xb0] sm:$0xff]
    %v363 = vld [vmem:[#allocation2 + $0xb8] sm:$0xff]
    %v364 = vld [vmem:[#allocation2 + $0xc0] sm:$0xff]
    %v365 = vld [vmem:[#allocation2 + $0xc8] sm:$0xff]
    %v366 = vld [vmem:[#allocation2 + $0xd0] sm:$0xff]
    %v367 = vld [vmem:[#allocation2 + $0xd8] sm:$0xff]
    %v368 = vld [vmem:[#allocation2 + $0xe0] sm:$0xff]
    %v369 = vld [vmem:[#allocation2 + $0xe8] sm:$0xff]
    %v370 = vld [vmem:[#allocation2 + $0xf0] sm:$0xff]
    %v371 = vld [vmem:[#allocation2 + $0xf8] sm:$0xff]
    %v372 = vld [vmem:[#allocation2 + $0x100] sm:$0xff]
    %v373 = vld [vmem:[#allocation2 + $0x108] sm:$0xff]
    %v374 = vld [vmem:[#allocation2 + $0x110] sm:$0xff]
    %v375 = vld [vmem:[#allocation2 + $0x118] sm:$0xff]
    %v376 = vld [vmem:[#allocation2 + $0x120] sm:$0xff]
    %v377 = vld [vmem:[#allocation2 + $0x128] sm:$0xff]
    %v378 = vld [vmem:[#allocation2 + $0x130] sm:$0xff]
    %v379 = vld [vmem:[#allocation2 + $0x138] sm:$0xff]
    %v380 = vld [vmem:[#allocation2 + $0x140] sm:$0xff]
    %v381 = vld [vmem:[#allocation2 + $0x148] sm:$0xff]
    %v382 = vld [vmem:[#allocation2 + $0x150] sm:$0xff]
    %v383 = vld [vmem:[#allocation2 + $0x158] sm:$0xff]
    %v384 = vld [vmem:[#allocation2 + $0x160] sm:$0xff]
    %v385 = vld [vmem:[#allocation2 + $0x168] sm:$0xff]
    %v386 = vld [vmem:[#allocation2 + $0x170] sm:$0xff]
    %v387 = vld [vmem:[#allocation2 + $0x178] sm:$0xff]
    %v388 = vld [vmem:[#allocation2 + $0x180] sm:$0xff]
    %v389 = vld [vmem:[#allocation2 + $0x188] sm:$0xff]
    %v390 = vld [vmem:[#allocation2 + $0x190] sm:$0xff]
    %v391 = vld [vmem:[#allocation2 + $0x198] sm:$0xff]
    %v392 = vld [vmem:[#allocation2 + $0x1a0] sm:$0xff]
    %v393 = vld [vmem:[#allocation2 + $0x1a8] sm:$0xff]
    %v394 = vld [vmem:[#allocation2 + $0x1b0] sm:$0xff]
    %v395 = vld [vmem:[#allocation2 + $0x1b8] sm:$0xff]
    %v396 = vld [vmem:[#allocation2 + $0x1c0] sm:$0xff]
    %v397 = vld [vmem:[#allocation2 + $0x1c8] sm:$0xff]
    %v398 = vld [vmem:[#allocation2 + $0x1d0] sm:$0xff]
    %v399 = vld [vmem:[#allocation2 + $0x1d8] sm:$0xff]
    %v400 = vld [vmem:[#allocation2 + $0x1e0] sm:$0xff]
    %v401 = vld [vmem:[#allocation2 + $0x1e8] sm:$0xff]
    %v402 = vld [vmem:[#allocation2 + $0x1f0] sm:$0xff]
    %v403 = vld [vmem:[#allocation2 + $0x1f8] sm:$0xff]
    %v404 = vand.u32 %v371, 4294901760
    %405 = vmatprep.subr.mxu0 %v404
    %v406 = vand.u32 %v370, 4294901760
    %407 = vmatpush1.msra.mxu0 %v406
    %v408 = vand.u32 %v369, 4294901760
    %409 = vmatprep.subr.mxu0 %v408
    %v410 = vand.u32 %v368, 4294901760
    %411 = vmatpush1.msra.mxu0 %v410
    %v412 = vand.u32 %v367, 4294901760
    %413 = vmatprep.subr.mxu0 %v412
    %v414 = vand.u32 %v366, 4294901760
    %415 = vmatpush1.msra.mxu0 %v414
    %v416 = vand.u32 %v365, 4294901760
    %417 = vmatprep.subr.mxu0 %v416
    %v418 = vand.u32 %v364, 4294901760
    %419 = vmatpush1.msra.mxu0 %v418
    %v420 = vand.u32 %v363, 4294901760
    %421 = vmatprep.subr.mxu0 %v420
    %v422 = vand.u32 %v362, 4294901760
    %423 = vmatpush1.msra.mxu0 %v422
    %v424 = vand.u32 %v361, 4294901760
    %425 = vmatprep.subr.mxu0 %v424
    %v426 = vand.u32 %v360, 4294901760
    %427 = vmatpush1.msra.mxu0 %v426
    %v428 = vand.u32 %v359, 4294901760
    %429 = vmatprep.subr.mxu0 %v428
    %v430 = vand.u32 %v358, 4294901760
    %431 = vmatpush1.msra.mxu0 %v430
    %v432 = vand.u32 %v357, 4294901760
    %433 = vmatprep.subr.mxu0 %v432
    %v434 = vand.u32 %v356, 4294901760
    %435 = vmatpush1.msra.mxu0 %v434
    %v436 = vand.u32 %v355, 4294901760
    %437 = vmatprep.subr.mxu0 %v436
    %v438 = vand.u32 %v354, 4294901760
    %439 = vmatpush1.msra.mxu0 %v438
    %v440 = vand.u32 %v353, 4294901760
    %441 = vmatprep.subr.mxu0 %v440
    %v442 = vand.u32 %v352, 4294901760
    %443 = vmatpush1.msra.mxu0 %v442
    %v444 = vand.u32 %v351, 4294901760
    %445 = vmatprep.subr.mxu0 %v444
    %v446 = vand.u32 %v350, 4294901760
    %447 = vmatpush1.msra.mxu0 %v446
    %v448 = vand.u32 %v349, 4294901760
    %449 = vmatprep.subr.mxu0 %v448
    %v450 = vand.u32 %v348, 4294901760
    %451 = vmatpush1.msra.mxu0 %v450
    %v452 = vand.u32 %v347, 4294901760
    %453 = vmatprep.subr.mxu0 %v452
    %v454 = vand.u32 %v346, 4294901760
    %455 = vmatpush1.msra.mxu0 %v454
    %v456 = vand.u32 %v345, 4294901760
    %457 = vmatprep.subr.mxu0 %v456
    %v458 = vand.u32 %v344, 4294901760
    %459 = vmatpush1.msra.mxu0 %v458
    %v460 = vand.u32 %v343, 4294901760
    %461 = vmatprep.subr.mxu0 %v460
    %v462 = vand.u32 %v342, 4294901760
    %463 = vmatpush1.msra.mxu0 %v462
    %v464 = vand.u32 %v341, 4294901760
    %465 = vmatprep.subr.mxu0 %v464
    %v466 = vand.u32 %v340, 4294901760
    %467 = vmatpush1.msra.mxu0 %v466
    %v468 = vand.u32 %v403, 4294901760
    %469 = vmatprep.subr.mxu0 %v468
    %v470 = vand.u32 %v402, 4294901760
    %471 = vmatpush2.msra.mxu0 %v470
    %v472 = vand.u32 %v401, 4294901760
    %473 = vmatprep.subr.mxu0 %v472
    %v474 = vand.u32 %v400, 4294901760
    %475 = vmatpush2.msra.mxu0 %v474
    %v476 = vand.u32 %v399, 4294901760
    %477 = vmatprep.subr.mxu0 %v476
    %v478 = vand.u32 %v398, 4294901760
    %479 = vmatpush2.msra.mxu0 %v478
    %v480 = vand.u32 %v397, 4294901760
    %481 = vmatprep.subr.mxu0 %v480
    %v482 = vand.u32 %v396, 4294901760
    %483 = vmatpush2.msra.mxu0 %v482
    %v484 = vand.u32 %v395, 4294901760
    %485 = vmatprep.subr.mxu0 %v484
    %v486 = vand.u32 %v394, 4294901760
    %487 = vmatpush2.msra.mxu0 %v486
    %v488 = vand.u32 %v393, 4294901760
    %489 = vmatprep.subr.mxu0 %v488
    %v490 = vand.u32 %v392, 4294901760
    %491 = vmatpush2.msra.mxu0 %v490
    %v492 = vand.u32 %v391, 4294901760
    %493 = vmatprep.subr.mxu0 %v492
    %v494 = vand.u32 %v390, 4294901760
    %495 = vmatpush2.msra.mxu0 %v494
    %v496 = vand.u32 %v389, 4294901760
    %497 = vmatprep.subr.mxu0 %v496
    %v498 = vand.u32 %v388, 4294901760
    %499 = vmatpush2.msra.mxu0 %v498
    %v500 = vand.u32 %v387, 4294901760
    %501 = vmatprep.subr.mxu0 %v500
    %v502 = vand.u32 %v386, 4294901760
    %503 = vmatpush2.msra.mxu0 %v502
    %v504 = vand.u32 %v385, 4294901760
    %505 = vmatprep.subr.mxu0 %v504
    %v506 = vand.u32 %v384, 4294901760
    %507 = vmatpush2.msra.mxu0 %v506
    %v508 = vand.u32 %v383, 4294901760
    %509 = vmatprep.subr.mxu0 %v508
    %v510 = vand.u32 %v382, 4294901760
    %511 = vmatpush2.msra.mxu0 %v510
    %v512 = vand.u32 %v381, 4294901760
    %513 = vmatprep.subr.mxu0 %v512
    %v514 = vand.u32 %v380, 4294901760
    %515 = vmatpush2.msra.mxu0 %v514
    %v516 = vand.u32 %v379, 4294901760
    %517 = vmatprep.subr.mxu0 %v516
    %v518 = vand.u32 %v378, 4294901760
    %519 = vmatpush2.msra.mxu0 %v518
    %v520 = vand.u32 %v377, 4294901760
    %521 = vmatprep.subr.mxu0 %v520
    %v522 = vand.u32 %v376, 4294901760
    %523 = vmatpush2.msra.mxu0 %v522
    %v524 = vand.u32 %v375, 4294901760
    %525 = vmatprep.subr.mxu0 %v524
    %v526 = vand.u32 %v374, 4294901760
    %527 = vmatpush2.msra.mxu0 %v526
    %v528 = vand.u32 %v373, 4294901760
    %529 = vmatprep.subr.mxu0 %v528
    %v530 = vand.u32 %v372, 4294901760
    %531 = vmatpush2.msra.mxu0 %v530
    %v532 = vand.u32 %v339, 4294901760
    %v533 = vsub.f32 %v339, %v532
    %v534 = vand.u32 %v533, 4294901760
    %v535 = vsub.f32 %v533, %v534
    %v536 = vand.u32 %v535, 4294901760
    %537 = vmatprep.mubr.f32.mxu0 %v536
    %v538 = vand.u32 %v338, 4294901760
    %v539 = vsub.f32 %v338, %v538
    %v540 = vand.u32 %v539, 4294901760
    %v541 = vsub.f32 %v539, %v540
    %v542 = vand.u32 %v541, 4294901760
    %543 = vmatmul.mubr.f32.gmra.mxu0 %v542
    %v544 = vpop.f32.mrf.mxu0
    %v545 = vadd.f32 0.0, %v544
    %v546 = vpop.f32.mrf.mxu0
    %v547 = vadd.f32 0.0, %v546
    %548 = vdwg.mxu0
    %v549 = vand.u32 %v371, 4294901760
    %v550 = vsub.f32 %v371, %v549
    %v551 = vand.u32 %v550, 4294901760
    %v552 = vsub.f32 %v550, %v551
    %v553 = vand.u32 %v552, 4294901760
    %554 = vmatprep.subr.mxu0 %v553
    %v555 = vand.u32 %v370, 4294901760
    %v556 = vsub.f32 %v370, %v555
    %v557 = vand.u32 %v556, 4294901760
    %v558 = vsub.f32 %v556, %v557
    %v559 = vand.u32 %v558, 4294901760
    %560 = vmatpush1.msra.mxu0 %v559
    %v561 = vand.u32 %v369, 4294901760
    %v562 = vsub.f32 %v369, %v561
    %v563 = vand.u32 %v562, 4294901760
    %v564 = vsub.f32 %v562, %v563
    %v565 = vand.u32 %v564, 4294901760
    %566 = vmatprep.subr.mxu0 %v565
    %v567 = vand.u32 %v368, 4294901760
    %v568 = vsub.f32 %v368, %v567
    %v569 = vand.u32 %v568, 4294901760
    %v570 = vsub.f32 %v568, %v569
    %v571 = vand.u32 %v570, 4294901760
    %572 = vmatpush1.msra.mxu0 %v571
    %v573 = vand.u32 %v367, 4294901760
    %v574 = vsub.f32 %v367, %v573
    %v575 = vand.u32 %v574, 4294901760
    %v576 = vsub.f32 %v574, %v575
    %v577 = vand.u32 %v576, 4294901760
    %578 = vmatprep.subr.mxu0 %v577
    %v579 = vand.u32 %v366, 4294901760
    %v580 = vsub.f32 %v366, %v579
    %v581 = vand.u32 %v580, 4294901760
    %v582 = vsub.f32 %v580, %v581
    %v583 = vand.u32 %v582, 4294901760
    %584 = vmatpush1.msra.mxu0 %v583
    %v585 = vand.u32 %v365, 4294901760
    %v586 = vsub.f32 %v365, %v585
    %v587 = vand.u32 %v586, 4294901760
    %v588 = vsub.f32 %v586, %v587
    %v589 = vand.u32 %v588, 4294901760
    %590 = vmatprep.subr.mxu0 %v589
    %v591 = vand.u32 %v364, 4294901760
    %v592 = vsub.f32 %v364, %v591
    %v593 = vand.u32 %v592, 4294901760
    %v594 = vsub.f32 %v592, %v593
    %v595 = vand.u32 %v594, 4294901760
    %596 = vmatpush1.msra.mxu0 %v595
    %v597 = vand.u32 %v363, 4294901760
    %v598 = vsub.f32 %v363, %v597
    %v599 = vand.u32 %v598, 4294901760
    %v600 = vsub.f32 %v598, %v599
    %v601 = vand.u32 %v600, 4294901760
    %602 = vmatprep.subr.mxu0 %v601
    %v603 = vand.u32 %v362, 4294901760
    %v604 = vsub.f32 %v362, %v603
    %v605 = vand.u32 %v604, 4294901760
    %v606 = vsub.f32 %v604, %v605
    %v607 = vand.u32 %v606, 4294901760
    %608 = vmatpush1.msra.mxu0 %v607
    %v609 = vand.u32 %v361, 4294901760
    %v610 = vsub.f32 %v361, %v609
    %v611 = vand.u32 %v610, 4294901760
    %v612 = vsub.f32 %v610, %v611
    %v613 = vand.u32 %v612, 4294901760
    %614 = vmatprep.subr.mxu0 %v613
    %v615 = vand.u32 %v360, 4294901760
    %v616 = vsub.f32 %v360, %v615
    %v617 = vand.u32 %v616, 4294901760
    %v618 = vsub.f32 %v616, %v617
    %v619 = vand.u32 %v618, 4294901760
    %620 = vmatpush1.msra.mxu0 %v619
    %v621 = vand.u32 %v359, 4294901760
    %v622 = vsub.f32 %v359, %v621
    %v623 = vand.u32 %v622, 4294901760
    %v624 = vsub.f32 %v622, %v623
    %v625 = vand.u32 %v624, 4294901760
    %626 = vmatprep.subr.mxu0 %v625
    %v627 = vand.u32 %v358, 4294901760
    %v628 = vsub.f32 %v358, %v627
    %v629 = vand.u32 %v628, 4294901760
    %v630 = vsub.f32 %v628, %v629
    %v631 = vand.u32 %v630, 4294901760
    %632 = vmatpush1.msra.mxu0 %v631
    %v633 = vand.u32 %v357, 4294901760
    %v634 = vsub.f32 %v357, %v633
    %v635 = vand.u32 %v634, 4294901760
    %v636 = vsub.f32 %v634, %v635
    %v637 = vand.u32 %v636, 4294901760
    %638 = vmatprep.subr.mxu0 %v637
    %v639 = vand.u32 %v356, 4294901760
    %v640 = vsub.f32 %v356, %v639
    %v641 = vand.u32 %v640, 4294901760
    %v642 = vsub.f32 %v640, %v641
    %v643 = vand.u32 %v642, 4294901760
    %644 = vmatpush1.msra.mxu0 %v643
    %v645 = vand.u32 %v355, 4294901760
    %v646 = vsub.f32 %v355, %v645
    %v647 = vand.u32 %v646, 4294901760
    %v648 = vsub.f32 %v646, %v647
    %v649 = vand.u32 %v648, 4294901760
    %650 = vmatprep.subr.mxu0 %v649
    %v651 = vand.u32 %v354, 4294901760
    %v652 = vsub.f32 %v354, %v651
    %v653 = vand.u32 %v652, 4294901760
    %v654 = vsub.f32 %v652, %v653
    %v655 = vand.u32 %v654, 4294901760
    %656 = vmatpush1.msra.mxu0 %v655
    %v657 = vand.u32 %v353, 4294901760
    %v658 = vsub.f32 %v353, %v657
    %v659 = vand.u32 %v658, 4294901760
    %v660 = vsub.f32 %v658, %v659
    %v661 = vand.u32 %v660, 4294901760
    %662 = vmatprep.subr.mxu0 %v661
    %v663 = vand.u32 %v352, 4294901760
    %v664 = vsub.f32 %v352, %v663
    %v665 = vand.u32 %v664, 4294901760
    %v666 = vsub.f32 %v664, %v665
    %v667 = vand.u32 %v666, 4294901760
    %668 = vmatpush1.msra.mxu0 %v667
    %v669 = vand.u32 %v351, 4294901760
    %v670 = vsub.f32 %v351, %v669
    %v671 = vand.u32 %v670, 4294901760
    %v672 = vsub.f32 %v670, %v671
    %v673 = vand.u32 %v672, 4294901760
    %674 = vmatprep.subr.mxu0 %v673
    %v675 = vand.u32 %v350, 4294901760
    %v676 = vsub.f32 %v350, %v675
    %v677 = vand.u32 %v676, 4294901760
    %v678 = vsub.f32 %v676, %v677
    %v679 = vand.u32 %v678, 4294901760
    %680 = vmatpush1.msra.mxu0 %v679
    %v681 = vand.u32 %v349, 4294901760
    %v682 = vsub.f32 %v349, %v681
    %v683 = vand.u32 %v682, 4294901760
    %v684 = vsub.f32 %v682, %v683
    %v685 = vand.u32 %v684, 4294901760
    %686 = vmatprep.subr.mxu0 %v685
    %v687 = vand.u32 %v348, 4294901760
    %v688 = vsub.f32 %v348, %v687
    %v689 = vand.u32 %v688, 4294901760
    %v690 = vsub.f32 %v688, %v689
    %v691 = vand.u32 %v690, 4294901760
    %692 = vmatpush1.msra.mxu0 %v691
    %v693 = vand.u32 %v347, 4294901760
    %v694 = vsub.f32 %v347, %v693
    %v695 = vand.u32 %v694, 4294901760
    %v696 = vsub.f32 %v694, %v695
    %v697 = vand.u32 %v696, 4294901760
    %698 = vmatprep.subr.mxu0 %v697
    %v699 = vand.u32 %v346, 4294901760
    %v700 = vsub.f32 %v346, %v699
    %v701 = vand.u32 %v700, 4294901760
    %v702 = vsub.f32 %v700, %v701
    %v703 = vand.u32 %v702, 4294901760
    %704 = vmatpush1.msra.mxu0 %v703
    %v705 = vand.u32 %v345, 4294901760
    %v706 = vsub.f32 %v345, %v705
    %v707 = vand.u32 %v706, 4294901760
    %v708 = vsub.f32 %v706, %v707
    %v709 = vand.u32 %v708, 4294901760
    %710 = vmatprep.subr.mxu0 %v709
    %v711 = vand.u32 %v344, 4294901760
    %v712 = vsub.f32 %v344, %v711
    %v713 = vand.u32 %v712, 4294901760
    %v714 = vsub.f32 %v712, %v713
    %v715 = vand.u32 %v714, 4294901760
    %716 = vmatpush1.msra.mxu0 %v715
    %v717 = vand.u32 %v343, 4294901760
    %v718 = vsub.f32 %v343, %v717
    %v719 = vand.u32 %v718, 4294901760
    %v720 = vsub.f32 %v718, %v719
    %v721 = vand.u32 %v720, 4294901760
    %722 = vmatprep.subr.mxu0 %v721
    %v723 = vand.u32 %v342, 4294901760
    %v724 = vsub.f32 %v342, %v723
    %v725 = vand.u32 %v724, 4294901760
    %v726 = vsub.f32 %v724, %v725
    %v727 = vand.u32 %v726, 4294901760
    %728 = vmatpush1.msra.mxu0 %v727
    %v729 = vand.u32 %v341, 4294901760
    %v730 = vsub.f32 %v341, %v729
    %v731 = vand.u32 %v730, 4294901760
    %v732 = vsub.f32 %v730, %v731
    %v733 = vand.u32 %v732, 4294901760
    %734 = vmatprep.subr.mxu0 %v733
    %v735 = vand.u32 %v340, 4294901760
    %v736 = vsub.f32 %v340, %v735
    %v737 = vand.u32 %v736, 4294901760
    %v738 = vsub.f32 %v736, %v737
    %v739 = vand.u32 %v738, 4294901760
    %740 = vmatpush1.msra.mxu0 %v739
    %v741 = vand.u32 %v403, 4294901760
    %v742 = vsub.f32 %v403, %v741
    %v743 = vand.u32 %v742, 4294901760
    %v744 = vsub.f32 %v742, %v743
    %v745 = vand.u32 %v744, 4294901760
    %746 = vmatprep.subr.mxu0 %v745
    %v747 = vand.u32 %v402, 4294901760
    %v748 = vsub.f32 %v402, %v747
    %v749 = vand.u32 %v748, 4294901760
    %v750 = vsub.f32 %v748, %v749
    %v751 = vand.u32 %v750, 4294901760
    %752 = vmatpush2.msra.mxu0 %v751
    %v753 = vand.u32 %v401, 4294901760
    %v754 = vsub.f32 %v401, %v753
    %v755 = vand.u32 %v754, 4294901760
    %v756 = vsub.f32 %v754, %v755
    %v757 = vand.u32 %v756, 4294901760
    %758 = vmatprep.subr.mxu0 %v757
    %v759 = vand.u32 %v400, 4294901760
    %v760 = vsub.f32 %v400, %v759
    %v761 = vand.u32 %v760, 4294901760
    %v762 = vsub.f32 %v760, %v761
    %v763 = vand.u32 %v762, 4294901760
    %764 = vmatpush2.msra.mxu0 %v763
    %v765 = vand.u32 %v399, 4294901760
    %v766 = vsub.f32 %v399, %v765
    %v767 = vand.u32 %v766, 4294901760
    %v768 = vsub.f32 %v766, %v767
    %v769 = vand.u32 %v768, 4294901760
    %770 = vmatprep.subr.mxu0 %v769
    %v771 = vand.u32 %v398, 4294901760
    %v772 = vsub.f32 %v398, %v771
    %v773 = vand.u32 %v772, 4294901760
    %v774 = vsub.f32 %v772, %v773
    %v775 = vand.u32 %v774, 4294901760
    %776 = vmatpush2.msra.mxu0 %v775
    %v777 = vand.u32 %v397, 4294901760
    %v778 = vsub.f32 %v397, %v777
    %v779 = vand.u32 %v778, 4294901760
    %v780 = vsub.f32 %v778, %v779
    %v781 = vand.u32 %v780, 4294901760
    %782 = vmatprep.subr.mxu0 %v781
    %v783 = vand.u32 %v396, 4294901760
    %v784 = vsub.f32 %v396, %v783
    %v785 = vand.u32 %v784, 4294901760
    %v786 = vsub.f32 %v784, %v785
    %v787 = vand.u32 %v786, 4294901760
    %788 = vmatpush2.msra.mxu0 %v787
    %v789 = vand.u32 %v395, 4294901760
    %v790 = vsub.f32 %v395, %v789
    %v791 = vand.u32 %v790, 4294901760
    %v792 = vsub.f32 %v790, %v791
    %v793 = vand.u32 %v792, 4294901760
    %794 = vmatprep.subr.mxu0 %v793
    %v795 = vand.u32 %v394, 4294901760
    %v796 = vsub.f32 %v394, %v795
    %v797 = vand.u32 %v796, 4294901760
    %v798 = vsub.f32 %v796, %v797
    %v799 = vand.u32 %v798, 4294901760
    %800 = vmatpush2.msra.mxu0 %v799
    %v801 = vand.u32 %v393, 4294901760
    %v802 = vsub.f32 %v393, %v801
    %v803 = vand.u32 %v802, 4294901760
    %v804 = vsub.f32 %v802, %v803
    %v805 = vand.u32 %v804, 4294901760
    %806 = vmatprep.subr.mxu0 %v805
    %v807 = vand.u32 %v392, 4294901760
    %v808 = vsub.f32 %v392, %v807
    %v809 = vand.u32 %v808, 4294901760
    %v810 = vsub.f32 %v808, %v809
    %v811 = vand.u32 %v810, 4294901760
    %812 = vmatpush2.msra.mxu0 %v811
    %v813 = vand.u32 %v391, 4294901760
    %v814 = vsub.f32 %v391, %v813
    %v815 = vand.u32 %v814, 4294901760
    %v816 = vsub.f32 %v814, %v815
    %v817 = vand.u32 %v816, 4294901760
    %818 = vmatprep.subr.mxu0 %v817
    %v819 = vand.u32 %v390, 4294901760
    %v820 = vsub.f32 %v390, %v819
    %v821 = vand.u32 %v820, 4294901760
    %v822 = vsub.f32 %v820, %v821
    %v823 = vand.u32 %v822, 4294901760
    %824 = vmatpush2.msra.mxu0 %v823
    %v825 = vand.u32 %v389, 4294901760
    %v826 = vsub.f32 %v389, %v825
    %v827 = vand.u32 %v826, 4294901760
    %v828 = vsub.f32 %v826, %v827
    %v829 = vand.u32 %v828, 4294901760
    %830 = vmatprep.subr.mxu0 %v829
    %v831 = vand.u32 %v388, 4294901760
    %v832 = vsub.f32 %v388, %v831
    %v833 = vand.u32 %v832, 4294901760
    %v834 = vsub.f32 %v832, %v833
    %v835 = vand.u32 %v834, 4294901760
    %836 = vmatpush2.msra.mxu0 %v835
    %v837 = vand.u32 %v387, 4294901760
    %v838 = vsub.f32 %v387, %v837
    %v839 = vand.u32 %v838, 4294901760
    %v840 = vsub.f32 %v838, %v839
    %v841 = vand.u32 %v840, 4294901760
    %842 = vmatprep.subr.mxu0 %v841
    %v843 = vand.u32 %v386, 4294901760
    %v844 = vsub.f32 %v386, %v843
    %v845 = vand.u32 %v844, 4294901760
    %v846 = vsub.f32 %v844, %v845
    %v847 = vand.u32 %v846, 4294901760
    %848 = vmatpush2.msra.mxu0 %v847
    %v849 = vand.u32 %v385, 4294901760
    %v850 = vsub.f32 %v385, %v849
    %v851 = vand.u32 %v850, 4294901760
    %v852 = vsub.f32 %v850, %v851
    %v853 = vand.u32 %v852, 4294901760
    %854 = vmatprep.subr.mxu0 %v853
    %v855 = vand.u32 %v384, 4294901760
    %v856 = vsub.f32 %v384, %v855
    %v857 = vand.u32 %v856, 4294901760
    %v858 = vsub.f32 %v856, %v857
    %v859 = vand.u32 %v858, 4294901760
    %860 = vmatpush2.msra.mxu0 %v859
    %v861 = vand.u32 %v383, 4294901760
    %v862 = vsub.f32 %v383, %v861
    %v863 = vand.u32 %v862, 4294901760
    %v864 = vsub.f32 %v862, %v863
    %v865 = vand.u32 %v864, 4294901760
    %866 = vmatprep.subr.mxu0 %v865
    %v867 = vand.u32 %v382, 4294901760
    %v868 = vsub.f32 %v382, %v867
    %v869 = vand.u32 %v868, 4294901760
    %v870 = vsub.f32 %v868, %v869
    %v871 = vand.u32 %v870, 4294901760
    %872 = vmatpush2.msra.mxu0 %v871
    %v873 = vand.u32 %v381, 4294901760
    %v874 = vsub.f32 %v381, %v873
    %v875 = vand.u32 %v874, 4294901760
    %v876 = vsub.f32 %v874, %v875
    %v877 = vand.u32 %v876, 4294901760
    %878 = vmatprep.subr.mxu0 %v877
    %v879 = vand.u32 %v380, 4294901760
    %v880 = vsub.f32 %v380, %v879
    %v881 = vand.u32 %v880, 4294901760
    %v882 = vsub.f32 %v880, %v881
    %v883 = vand.u32 %v882, 4294901760
    %884 = vmatpush2.msra.mxu0 %v883
    %v885 = vand.u32 %v379, 4294901760
    %v886 = vsub.f32 %v379, %v885
    %v887 = vand.u32 %v886, 4294901760
    %v888 = vsub.f32 %v886, %v887
    %v889 = vand.u32 %v888, 4294901760
    %890 = vmatprep.subr.mxu0 %v889
    %v891 = vand.u32 %v378, 4294901760
    %v892 = vsub.f32 %v378, %v891
    %v893 = vand.u32 %v892, 4294901760
    %v894 = vsub.f32 %v892, %v893
    %v895 = vand.u32 %v894, 4294901760
    %896 = vmatpush2.msra.mxu0 %v895
    %v897 = vand.u32 %v377, 4294901760
    %v898 = vsub.f32 %v377, %v897
    %v899 = vand.u32 %v898, 4294901760
    %v900 = vsub.f32 %v898, %v899
    %v901 = vand.u32 %v900, 4294901760
    %902 = vmatprep.subr.mxu0 %v901
    %v903 = vand.u32 %v376, 4294901760
    %v904 = vsub.f32 %v376, %v903
    %v905 = vand.u32 %v904, 4294901760
    %v906 = vsub.f32 %v904, %v905
    %v907 = vand.u32 %v906, 4294901760
    %908 = vmatpush2.msra.mxu0 %v907
    %v909 = vand.u32 %v375, 4294901760
    %v910 = vsub.f32 %v375, %v909
    %v911 = vand.u32 %v910, 4294901760
    %v912 = vsub.f32 %v910, %v911
    %v913 = vand.u32 %v912, 4294901760
    %914 = vmatprep.subr.mxu0 %v913
    %v915 = vand.u32 %v374, 4294901760
    %v916 = vsub.f32 %v374, %v915
    %v917 = vand.u32 %v916, 4294901760
    %v918 = vsub.f32 %v916, %v917
    %v919 = vand.u32 %v918, 4294901760
    %920 = vmatpush2.msra.mxu0 %v919
    %v921 = vand.u32 %v373, 4294901760
    %v922 = vsub.f32 %v373, %v921
    %v923 = vand.u32 %v922, 4294901760
    %v924 = vsub.f32 %v922, %v923
    %v925 = vand.u32 %v924, 4294901760
    %926 = vmatprep.subr.mxu0 %v925
    %v927 = vand.u32 %v372, 4294901760
    %v928 = vsub.f32 %v372, %v927
    %v929 = vand.u32 %v928, 4294901760
    %v930 = vsub.f32 %v928, %v929
    %v931 = vand.u32 %v930, 4294901760
    %932 = vmatpush2.msra.mxu0 %v931
    %v933 = vand.u32 %v339, 4294901760
    %934 = vmatprep.mubr.f32.mxu0 %v933
    %v935 = vand.u32 %v338, 4294901760
    %936 = vmatmul.mubr.f32.gmra.mxu0 %v935
    %v937 = vpop.f32.mrf.mxu0
    %v938 = vadd.f32 %v545, %v937
    %v939 = vpop.f32.mrf.mxu0
    %v940 = vadd.f32 %v547, %v939
    %941 = vdwg.mxu0
    %v942 = vand.u32 %v371, 4294901760
    %v943 = vsub.f32 %v371, %v942
    %944 = vmatprep.subr.mxu0 %v943
    %v945 = vand.u32 %v370, 4294901760
    %v946 = vsub.f32 %v370, %v945
    %947 = vmatpush1.msra.mxu0 %v946
    %v948 = vand.u32 %v369, 4294901760
    %v949 = vsub.f32 %v369, %v948
    %950 = vmatprep.subr.mxu0 %v949
    %v951 = vand.u32 %v368, 4294901760
    %v952 = vsub.f32 %v368, %v951
    %953 = vmatpush1.msra.mxu0 %v952
    %v954 = vand.u32 %v367, 4294901760
    %v955 = vsub.f32 %v367, %v954
    %956 = vmatprep.subr.mxu0 %v955
    %v957 = vand.u32 %v366, 4294901760
    %v958 = vsub.f32 %v366, %v957
    %959 = vmatpush1.msra.mxu0 %v958
    %v960 = vand.u32 %v365, 4294901760
    %v961 = vsub.f32 %v365, %v960
    %962 = vmatprep.subr.mxu0 %v961
    %v963 = vand.u32 %v364, 4294901760
    %v964 = vsub.f32 %v364, %v963
    %965 = vmatpush1.msra.mxu0 %v964
    %v966 = vand.u32 %v363, 4294901760
    %v967 = vsub.f32 %v363, %v966
    %968 = vmatprep.subr.mxu0 %v967
    %v969 = vand.u32 %v362, 4294901760
    %v970 = vsub.f32 %v362, %v969
    %971 = vmatpush1.msra.mxu0 %v970
    %v972 = vand.u32 %v361, 4294901760
    %v973 = vsub.f32 %v361, %v972
    %974 = vmatprep.subr.mxu0 %v973
    %v975 = vand.u32 %v360, 4294901760
    %v976 = vsub.f32 %v360, %v975
    %977 = vmatpush1.msra.mxu0 %v976
    %v978 = vand.u32 %v359, 4294901760
    %v979 = vsub.f32 %v359, %v978
    %980 = vmatprep.subr.mxu0 %v979
    %v981 = vand.u32 %v358, 4294901760
    %v982 = vsub.f32 %v358, %v981
    %983 = vmatpush1.msra.mxu0 %v982
    %v984 = vand.u32 %v357, 4294901760
    %v985 = vsub.f32 %v357, %v984
    %986 = vmatprep.subr.mxu0 %v985
    %v987 = vand.u32 %v356, 4294901760
    %v988 = vsub.f32 %v356, %v987
    %989 = vmatpush1.msra.mxu0 %v988
    %v990 = vand.u32 %v355, 4294901760
    %v991 = vsub.f32 %v355, %v990
    %992 = vmatprep.subr.mxu0 %v991
    %v993 = vand.u32 %v354, 4294901760
    %v994 = vsub.f32 %v354, %v993
    %995 = vmatpush1.msra.mxu0 %v994
    %v996 = vand.u32 %v353, 4294901760
    %v997 = vsub.f32 %v353, %v996
    %998 = vmatprep.subr.mxu0 %v997
    %v999 = vand.u32 %v352, 4294901760
    %v1000 = vsub.f32 %v352, %v999
    %1001 = vmatpush1.msra.mxu0 %v1000
    %v1002 = vand.u32 %v351, 4294901760
    %v1003 = vsub.f32 %v351, %v1002
    %1004 = vmatprep.subr.mxu0 %v1003
    %v1005 = vand.u32 %v350, 4294901760
    %v1006 = vsub.f32 %v350, %v1005
    %1007 = vmatpush1.msra.mxu0 %v1006
    %v1008 = vand.u32 %v349, 4294901760
    %v1009 = vsub.f32 %v349, %v1008
    %1010 = vmatprep.subr.mxu0 %v1009
    %v1011 = vand.u32 %v348, 4294901760
    %v1012 = vsub.f32 %v348, %v1011
    %1013 = vmatpush1.msra.mxu0 %v1012
    %v1014 = vand.u32 %v347, 4294901760
    %v1015 = vsub.f32 %v347, %v1014
    %1016 = vmatprep.subr.mxu0 %v1015
    %v1017 = vand.u32 %v346, 4294901760
    %v1018 = vsub.f32 %v346, %v1017
    %1019 = vmatpush1.msra.mxu0 %v1018
    %v1020 = vand.u32 %v345, 4294901760
    %v1021 = vsub.f32 %v345, %v1020
    %1022 = vmatprep.subr.mxu0 %v1021
    %v1023 = vand.u32 %v344, 4294901760
    %v1024 = vsub.f32 %v344, %v1023
    %1025 = vmatpush1.msra.mxu0 %v1024
    %v1026 = vand.u32 %v343, 4294901760
    %v1027 = vsub.f32 %v343, %v1026
    %1028 = vmatprep.subr.mxu0 %v1027
    %v1029 = vand.u32 %v342, 4294901760
    %v1030 = vsub.f32 %v342, %v1029
    %1031 = vmatpush1.msra.mxu0 %v1030
    %v1032 = vand.u32 %v341, 4294901760
    %v1033 = vsub.f32 %v341, %v1032
    %1034 = vmatprep.subr.mxu0 %v1033
    %v1035 = vand.u32 %v340, 4294901760
    %v1036 = vsub.f32 %v340, %v1035
    %1037 = vmatpush1.msra.mxu0 %v1036
    %v1038 = vand.u32 %v403, 4294901760
    %v1039 = vsub.f32 %v403, %v1038
    %1040 = vmatprep.subr.mxu0 %v1039
    %v1041 = vand.u32 %v402, 4294901760
    %v1042 = vsub.f32 %v402, %v1041
    %1043 = vmatpush2.msra.mxu0 %v1042
    %v1044 = vand.u32 %v401, 4294901760
    %v1045 = vsub.f32 %v401, %v1044
    %1046 = vmatprep.subr.mxu0 %v1045
    %v1047 = vand.u32 %v400, 4294901760
    %v1048 = vsub.f32 %v400, %v1047
    %1049 = vmatpush2.msra.mxu0 %v1048
    %v1050 = vand.u32 %v399, 4294901760
    %v1051 = vsub.f32 %v399, %v1050
    %1052 = vmatprep.subr.mxu0 %v1051
    %v1053 = vand.u32 %v398, 4294901760
    %v1054 = vsub.f32 %v398, %v1053
    %1055 = vmatpush2.msra.mxu0 %v1054
    %v1056 = vand.u32 %v397, 4294901760
    %v1057 = vsub.f32 %v397, %v1056
    %1058 = vmatprep.subr.mxu0 %v1057
    %v1059 = vand.u32 %v396, 4294901760
    %v1060 = vsub.f32 %v396, %v1059
    %1061 = vmatpush2.msra.mxu0 %v1060
    %v1062 = vand.u32 %v395, 4294901760
    %v1063 = vsub.f32 %v395, %v1062
    %1064 = vmatprep.subr.mxu0 %v1063
    %v1065 = vand.u32 %v394, 4294901760
    %v1066 = vsub.f32 %v394, %v1065
    %1067 = vmatpush2.msra.mxu0 %v1066
    %v1068 = vand.u32 %v393, 4294901760
    %v1069 = vsub.f32 %v393, %v1068
    %1070 = vmatprep.subr.mxu0 %v1069
    %v1071 = vand.u32 %v392, 4294901760
    %v1072 = vsub.f32 %v392, %v1071
    %1073 = vmatpush2.msra.mxu0 %v1072
    %v1074 = vand.u32 %v391, 4294901760
    %v1075 = vsub.f32 %v391, %v1074
    %1076 = vmatprep.subr.mxu0 %v1075
    %v1077 = vand.u32 %v390, 4294901760
    %v1078 = vsub.f32 %v390, %v1077
    %1079 = vmatpush2.msra.mxu0 %v1078
    %v1080 = vand.u32 %v389, 4294901760
    %v1081 = vsub.f32 %v389, %v1080
    %1082 = vmatprep.subr.mxu0 %v1081
    %v1083 = vand.u32 %v388, 4294901760
    %v1084 = vsub.f32 %v388, %v1083
    %1085 = vmatpush2.msra.mxu0 %v1084
    %v1086 = vand.u32 %v387, 4294901760
    %v1087 = vsub.f32 %v387, %v1086
    %1088 = vmatprep.subr.mxu0 %v1087
    %v1089 = vand.u32 %v386, 4294901760
    %v1090 = vsub.f32 %v386, %v1089
    %1091 = vmatpush2.msra.mxu0 %v1090
    %v1092 = vand.u32 %v385, 4294901760
    %v1093 = vsub.f32 %v385, %v1092
    %1094 = vmatprep.subr.mxu0 %v1093
    %v1095 = vand.u32 %v384, 4294901760
    %v1096 = vsub.f32 %v384, %v1095
    %1097 = vmatpush2.msra.mxu0 %v1096
    %v1098 = vand.u32 %v383, 4294901760
    %v1099 = vsub.f32 %v383, %v1098
    %1100 = vmatprep.subr.mxu0 %v1099
    %v1101 = vand.u32 %v382, 4294901760
    %v1102 = vsub.f32 %v382, %v1101
    %1103 = vmatpush2.msra.mxu0 %v1102
    %v1104 = vand.u32 %v381, 4294901760
    %v1105 = vsub.f32 %v381, %v1104
    %1106 = vmatprep.subr.mxu0 %v1105
    %v1107 = vand.u32 %v380, 4294901760
    %v1108 = vsub.f32 %v380, %v1107
    %1109 = vmatpush2.msra.mxu0 %v1108
    %v1110 = vand.u32 %v379, 4294901760
    %v1111 = vsub.f32 %v379, %v1110
    %1112 = vmatprep.subr.mxu0 %v1111
    %v1113 = vand.u32 %v378, 4294901760
    %v1114 = vsub.f32 %v378, %v1113
    %1115 = vmatpush2.msra.mxu0 %v1114
    %v1116 = vand.u32 %v377, 4294901760
    %v1117 = vsub.f32 %v377, %v1116
    %1118 = vmatprep.subr.mxu0 %v1117
    %v1119 = vand.u32 %v376, 4294901760
    %v1120 = vsub.f32 %v376, %v1119
    %1121 = vmatpush2.msra.mxu0 %v1120
    %v1122 = vand.u32 %v375, 4294901760
    %v1123 = vsub.f32 %v375, %v1122
    %1124 = vmatprep.subr.mxu0 %v1123
    %v1125 = vand.u32 %v374, 4294901760
    %v1126 = vsub.f32 %v374, %v1125
    %1127 = vmatpush2.msra.mxu0 %v1126
    %v1128 = vand.u32 %v373, 4294901760
    %v1129 = vsub.f32 %v373, %v1128
    %1130 = vmatprep.subr.mxu0 %v1129
    %v1131 = vand.u32 %v372, 4294901760
    %v1132 = vsub.f32 %v372, %v1131
    %1133 = vmatpush2.msra.mxu0 %v1132
    %v1134 = vand.u32 %v339, 4294901760
    %v1135 = vsub.f32 %v339, %v1134
    %1136 = vmatprep.mubr.f32.mxu0 %v1135
    %v1137 = vand.u32 %v338, 4294901760
    %v1138 = vsub.f32 %v338, %v1137
    %1139 = vmatmul.mubr.f32.gmra.mxu0 %v1138
    %v1140 = vpop.f32.mrf.mxu0
    %v1141 = vadd.f32 %v938, %v1140
    %v1142 = vpop.f32.mrf.mxu0
    %v1143 = vadd.f32 %v940, %v1142
    %1144 = vdwg.mxu0
    %v1145 = vand.u32 %v371, 4294901760
    %1146 = vmatprep.subr.mxu0 %v1145
    %v1147 = vand.u32 %v370, 4294901760
    %1148 = vmatpush1.msra.mxu0 %v1147
    %v1149 = vand.u32 %v369, 4294901760
    %1150 = vmatprep.subr.mxu0 %v1149
    %v1151 = vand.u32 %v368, 4294901760
    %1152 = vmatpush1.msra.mxu0 %v1151
    %v1153 = vand.u32 %v367, 4294901760
    %1154 = vmatprep.subr.mxu0 %v1153
    %v1155 = vand.u32 %v366, 4294901760
    %1156 = vmatpush1.msra.mxu0 %v1155
    %v1157 = vand.u32 %v365, 4294901760
    %1158 = vmatprep.subr.mxu0 %v1157
    %v1159 = vand.u32 %v364, 4294901760
    %1160 = vmatpush1.msra.mxu0 %v1159
    %v1161 = vand.u32 %v363, 4294901760
    %1162 = vmatprep.subr.mxu0 %v1161
    %v1163 = vand.u32 %v362, 4294901760
    %1164 = vmatpush1.msra.mxu0 %v1163
    %v1165 = vand.u32 %v361, 4294901760
    %1166 = vmatprep.subr.mxu0 %v1165
    %v1167 = vand.u32 %v360, 4294901760
    %1168 = vmatpush1.msra.mxu0 %v1167
    %v1169 = vand.u32 %v359, 4294901760
    %1170 = vmatprep.subr.mxu0 %v1169
    %v1171 = vand.u32 %v358, 4294901760
    %1172 = vmatpush1.msra.mxu0 %v1171
    %v1173 = vand.u32 %v357, 4294901760
    %1174 = vmatprep.subr.mxu0 %v1173
    %v1175 = vand.u32 %v356, 4294901760
    %1176 = vmatpush1.msra.mxu0 %v1175
    %v1177 = vand.u32 %v355, 4294901760
    %1178 = vmatprep.subr.mxu0 %v1177
    %v1179 = vand.u32 %v354, 4294901760
    %1180 = vmatpush1.msra.mxu0 %v1179
    %v1181 = vand.u32 %v353, 4294901760
    %1182 = vmatprep.subr.mxu0 %v1181
    %v1183 = vand.u32 %v352, 4294901760
    %1184 = vmatpush1.msra.mxu0 %v1183
    %v1185 = vand.u32 %v351, 4294901760
    %1186 = vmatprep.subr.mxu0 %v1185
    %v1187 = vand.u32 %v350, 4294901760
    %1188 = vmatpush1.msra.mxu0 %v1187
    %v1189 = vand.u32 %v349, 4294901760
    %1190 = vmatprep.subr.mxu0 %v1189
    %v1191 = vand.u32 %v348, 4294901760
    %1192 = vmatpush1.msra.mxu0 %v1191
    %v1193 = vand.u32 %v347, 4294901760
    %1194 = vmatprep.subr.mxu0 %v1193
    %v1195 = vand.u32 %v346, 4294901760
    %1196 = vmatpush1.msra.mxu0 %v1195
    %v1197 = vand.u32 %v345, 4294901760
    %1198 = vmatprep.subr.mxu0 %v1197
    %v1199 = vand.u32 %v344, 4294901760
    %1200 = vmatpush1.msra.mxu0 %v1199
    %v1201 = vand.u32 %v343, 4294901760
    %1202 = vmatprep.subr.mxu0 %v1201
    %v1203 = vand.u32 %v342, 4294901760
    %1204 = vmatpush1.msra.mxu0 %v1203
    %v1205 = vand.u32 %v341, 4294901760
    %1206 = vmatprep.subr.mxu0 %v1205
    %v1207 = vand.u32 %v340, 4294901760
    %1208 = vmatpush1.msra.mxu0 %v1207
    %v1209 = vand.u32 %v403, 4294901760
    %1210 = vmatprep.subr.mxu0 %v1209
    %v1211 = vand.u32 %v402, 4294901760
    %1212 = vmatpush2.msra.mxu0 %v1211
    %v1213 = vand.u32 %v401, 4294901760
    %1214 = vmatprep.subr.mxu0 %v1213
    %v1215 = vand.u32 %v400, 4294901760
    %1216 = vmatpush2.msra.mxu0 %v1215
    %v1217 = vand.u32 %v399, 4294901760
    %1218 = vmatprep.subr.mxu0 %v1217
    %v1219 = vand.u32 %v398, 4294901760
    %1220 = vmatpush2.msra.mxu0 %v1219
    %v1221 = vand.u32 %v397, 4294901760
    %1222 = vmatprep.subr.mxu0 %v1221
    %v1223 = vand.u32 %v396, 4294901760
    %1224 = vmatpush2.msra.mxu0 %v1223
    %v1225 = vand.u32 %v395, 4294901760
    %1226 = vmatprep.subr.mxu0 %v1225
    %v1227 = vand.u32 %v394, 4294901760
    %1228 = vmatpush2.msra.mxu0 %v1227
    %v1229 = vand.u32 %v393, 4294901760
    %1230 = vmatprep.subr.mxu0 %v1229
    %v1231 = vand.u32 %v392, 4294901760
    %1232 = vmatpush2.msra.mxu0 %v1231
    %v1233 = vand.u32 %v391, 4294901760
    %1234 = vmatprep.subr.mxu0 %v1233
    %v1235 = vand.u32 %v390, 4294901760
    %1236 = vmatpush2.msra.mxu0 %v1235
    %v1237 = vand.u32 %v389, 4294901760
    %1238 = vmatprep.subr.mxu0 %v1237
    %v1239 = vand.u32 %v388, 4294901760
    %1240 = vmatpush2.msra.mxu0 %v1239
    %v1241 = vand.u32 %v387, 4294901760
    %1242 = vmatprep.subr.mxu0 %v1241
    %v1243 = vand.u32 %v386, 4294901760
    %1244 = vmatpush2.msra.mxu0 %v1243
    %v1245 = vand.u32 %v385, 4294901760
    %1246 = vmatprep.subr.mxu0 %v1245
    %v1247 = vand.u32 %v384, 4294901760
    %1248 = vmatpush2.msra.mxu0 %v1247
    %v1249 = vand.u32 %v383, 4294901760
    %1250 = vmatprep.subr.mxu0 %v1249
    %v1251 = vand.u32 %v382, 4294901760
    %1252 = vmatpush2.msra.mxu0 %v1251
    %v1253 = vand.u32 %v381, 4294901760
    %1254 = vmatprep.subr.mxu0 %v1253
    %v1255 = vand.u32 %v380, 4294901760
    %1256 = vmatpush2.msra.mxu0 %v1255
    %v1257 = vand.u32 %v379, 4294901760
    %1258 = vmatprep.subr.mxu0 %v1257
    %v1259 = vand.u32 %v378, 4294901760
    %1260 = vmatpush2.msra.mxu0 %v1259
    %v1261 = vand.u32 %v377, 4294901760
    %1262 = vmatprep.subr.mxu0 %v1261
    %v1263 = vand.u32 %v376, 4294901760
    %1264 = vmatpush2.msra.mxu0 %v1263
    %v1265 = vand.u32 %v375, 4294901760
    %1266 = vmatprep.subr.mxu0 %v1265
    %v1267 = vand.u32 %v374, 4294901760
    %1268 = vmatpush2.msra.mxu0 %v1267
    %v1269 = vand.u32 %v373, 4294901760
    %1270 = vmatprep.subr.mxu0 %v1269
    %v1271 = vand.u32 %v372, 4294901760
    %1272 = vmatpush2.msra.mxu0 %v1271
    %v1273 = vand.u32 %v339, 4294901760
    %v1274 = vsub.f32 %v339, %v1273
    %v1275 = vand.u32 %v1274, 4294901760
    %1276 = vmatprep.mubr.f32.mxu0 %v1275
    %v1277 = vand.u32 %v338, 4294901760
    %v1278 = vsub.f32 %v338, %v1277
    %v1279 = vand.u32 %v1278, 4294901760
    %1280 = vmatmul.mubr.f32.gmra.mxu0 %v1279
    %v1281 = vpop.f32.mrf.mxu0
    %v1282 = vadd.f32 %v1141, %v1281
    %v1283 = vpop.f32.mrf.mxu0
    %v1284 = vadd.f32 %v1143, %v1283
    %1285 = vdwg.mxu0
    %v1286 = vand.u32 %v371, 4294901760
    %v1287 = vsub.f32 %v371, %v1286
    %v1288 = vand.u32 %v1287, 4294901760
    %1289 = vmatprep.subr.mxu0 %v1288
    %v1290 = vand.u32 %v370, 4294901760
    %v1291 = vsub.f32 %v370, %v1290
    %v1292 = vand.u32 %v1291, 4294901760
    %1293 = vmatpush1.msra.mxu0 %v1292
    %v1294 = vand.u32 %v369, 4294901760
    %v1295 = vsub.f32 %v369, %v1294
    %v1296 = vand.u32 %v1295, 4294901760
    %1297 = vmatprep.subr.mxu0 %v1296
    %v1298 = vand.u32 %v368, 4294901760
    %v1299 = vsub.f32 %v368, %v1298
    %v1300 = vand.u32 %v1299, 4294901760
    %1301 = vmatpush1.msra.mxu0 %v1300
    %v1302 = vand.u32 %v367, 4294901760
    %v1303 = vsub.f32 %v367, %v1302
    %v1304 = vand.u32 %v1303, 4294901760
    %1305 = vmatprep.subr.mxu0 %v1304
    %v1306 = vand.u32 %v366, 4294901760
    %v1307 = vsub.f32 %v366, %v1306
    %v1308 = vand.u32 %v1307, 4294901760
    %1309 = vmatpush1.msra.mxu0 %v1308
    %v1310 = vand.u32 %v365, 4294901760
    %v1311 = vsub.f32 %v365, %v1310
    %v1312 = vand.u32 %v1311, 4294901760
    %1313 = vmatprep.subr.mxu0 %v1312
    %v1314 = vand.u32 %v364, 4294901760
    %v1315 = vsub.f32 %v364, %v1314
    %v1316 = vand.u32 %v1315, 4294901760
    %1317 = vmatpush1.msra.mxu0 %v1316
    %v1318 = vand.u32 %v363, 4294901760
    %v1319 = vsub.f32 %v363, %v1318
    %v1320 = vand.u32 %v1319, 4294901760
    %1321 = vmatprep.subr.mxu0 %v1320
    %v1322 = vand.u32 %v362, 4294901760
    %v1323 = vsub.f32 %v362, %v1322
    %v1324 = vand.u32 %v1323, 4294901760
    %1325 = vmatpush1.msra.mxu0 %v1324
    %v1326 = vand.u32 %v361, 4294901760
    %v1327 = vsub.f32 %v361, %v1326
    %v1328 = vand.u32 %v1327, 4294901760
    %1329 = vmatprep.subr.mxu0 %v1328
    %v1330 = vand.u32 %v360, 4294901760
    %v1331 = vsub.f32 %v360, %v1330
    %v1332 = vand.u32 %v1331, 4294901760
    %1333 = vmatpush1.msra.mxu0 %v1332
    %v1334 = vand.u32 %v359, 4294901760
    %v1335 = vsub.f32 %v359, %v1334
    %v1336 = vand.u32 %v1335, 4294901760
    %1337 = vmatprep.subr.mxu0 %v1336
    %v1338 = vand.u32 %v358, 4294901760
    %v1339 = vsub.f32 %v358, %v1338
    %v1340 = vand.u32 %v1339, 4294901760
    %1341 = vmatpush1.msra.mxu0 %v1340
    %v1342 = vand.u32 %v357, 4294901760
    %v1343 = vsub.f32 %v357, %v1342
    %v1344 = vand.u32 %v1343, 4294901760
    %1345 = vmatprep.subr.mxu0 %v1344
    %v1346 = vand.u32 %v356, 4294901760
    %v1347 = vsub.f32 %v356, %v1346
    %v1348 = vand.u32 %v1347, 4294901760
    %1349 = vmatpush1.msra.mxu0 %v1348
    %v1350 = vand.u32 %v355, 4294901760
    %v1351 = vsub.f32 %v355, %v1350
    %v1352 = vand.u32 %v1351, 4294901760
    %1353 = vmatprep.subr.mxu0 %v1352
    %v1354 = vand.u32 %v354, 4294901760
    %v1355 = vsub.f32 %v354, %v1354
    %v1356 = vand.u32 %v1355, 4294901760
    %1357 = vmatpush1.msra.mxu0 %v1356
    %v1358 = vand.u32 %v353, 4294901760
    %v1359 = vsub.f32 %v353, %v1358
    %v1360 = vand.u32 %v1359, 4294901760
    %1361 = vmatprep.subr.mxu0 %v1360
    %v1362 = vand.u32 %v352, 4294901760
    %v1363 = vsub.f32 %v352, %v1362
    %v1364 = vand.u32 %v1363, 4294901760
    %1365 = vmatpush1.msra.mxu0 %v1364
    %v1366 = vand.u32 %v351, 4294901760
    %v1367 = vsub.f32 %v351, %v1366
    %v1368 = vand.u32 %v1367, 4294901760
    %1369 = vmatprep.subr.mxu0 %v1368
    %v1370 = vand.u32 %v350, 4294901760
    %v1371 = vsub.f32 %v350, %v1370
    %v1372 = vand.u32 %v1371, 4294901760
    %1373 = vmatpush1.msra.mxu0 %v1372
    %v1374 = vand.u32 %v349, 4294901760
    %v1375 = vsub.f32 %v349, %v1374
    %v1376 = vand.u32 %v1375, 4294901760
    %1377 = vmatprep.subr.mxu0 %v1376
    %v1378 = vand.u32 %v348, 4294901760
    %v1379 = vsub.f32 %v348, %v1378
    %v1380 = vand.u32 %v1379, 4294901760
    %1381 = vmatpush1.msra.mxu0 %v1380
    %v1382 = vand.u32 %v347, 4294901760
    %v1383 = vsub.f32 %v347, %v1382
    %v1384 = vand.u32 %v1383, 4294901760
    %1385 = vmatprep.subr.mxu0 %v1384
    %v1386 = vand.u32 %v346, 4294901760
    %v1387 = vsub.f32 %v346, %v1386
    %v1388 = vand.u32 %v1387, 4294901760
    %1389 = vmatpush1.msra.mxu0 %v1388
    %v1390 = vand.u32 %v345, 4294901760
    %v1391 = vsub.f32 %v345, %v1390
    %v1392 = vand.u32 %v1391, 4294901760
    %1393 = vmatprep.subr.mxu0 %v1392
    %v1394 = vand.u32 %v344, 4294901760
    %v1395 = vsub.f32 %v344, %v1394
    %v1396 = vand.u32 %v1395, 4294901760
    %1397 = vmatpush1.msra.mxu0 %v1396
    %v1398 = vand.u32 %v343, 4294901760
    %v1399 = vsub.f32 %v343, %v1398
    %v1400 = vand.u32 %v1399, 4294901760
    %1401 = vmatprep.subr.mxu0 %v1400
    %v1402 = vand.u32 %v342, 4294901760
    %v1403 = vsub.f32 %v342, %v1402
    %v1404 = vand.u32 %v1403, 4294901760
    %1405 = vmatpush1.msra.mxu0 %v1404
    %v1406 = vand.u32 %v341, 4294901760
    %v1407 = vsub.f32 %v341, %v1406
    %v1408 = vand.u32 %v1407, 4294901760
    %1409 = vmatprep.subr.mxu0 %v1408
    %v1410 = vand.u32 %v340, 4294901760
    %v1411 = vsub.f32 %v340, %v1410
    %v1412 = vand.u32 %v1411, 4294901760
    %1413 = vmatpush1.msra.mxu0 %v1412
    %v1414 = vand.u32 %v403, 4294901760
    %v1415 = vsub.f32 %v403, %v1414
    %v1416 = vand.u32 %v1415, 4294901760
    %1417 = vmatprep.subr.mxu0 %v1416
    %v1418 = vand.u32 %v402, 4294901760
    %v1419 = vsub.f32 %v402, %v1418
    %v1420 = vand.u32 %v1419, 4294901760
    %1421 = vmatpush2.msra.mxu0 %v1420
    %v1422 = vand.u32 %v401, 4294901760
    %v1423 = vsub.f32 %v401, %v1422
    %v1424 = vand.u32 %v1423, 4294901760
    %1425 = vmatprep.subr.mxu0 %v1424
    %v1426 = vand.u32 %v400, 4294901760
    %v1427 = vsub.f32 %v400, %v1426
    %v1428 = vand.u32 %v1427, 4294901760
    %1429 = vmatpush2.msra.mxu0 %v1428
    %v1430 = vand.u32 %v399, 4294901760
    %v1431 = vsub.f32 %v399, %v1430
    %v1432 = vand.u32 %v1431, 4294901760
    %1433 = vmatprep.subr.mxu0 %v1432
    %v1434 = vand.u32 %v398, 4294901760
    %v1435 = vsub.f32 %v398, %v1434
    %v1436 = vand.u32 %v1435, 4294901760
    %1437 = vmatpush2.msra.mxu0 %v1436
    %v1438 = vand.u32 %v397, 4294901760
    %v1439 = vsub.f32 %v397, %v1438
    %v1440 = vand.u32 %v1439, 4294901760
    %1441 = vmatprep.subr.mxu0 %v1440
    %v1442 = vand.u32 %v396, 4294901760
    %v1443 = vsub.f32 %v396, %v1442
    %v1444 = vand.u32 %v1443, 4294901760
    %1445 = vmatpush2.msra.mxu0 %v1444
    %v1446 = vand.u32 %v395, 4294901760
    %v1447 = vsub.f32 %v395, %v1446
    %v1448 = vand.u32 %v1447, 4294901760
    %1449 = vmatprep.subr.mxu0 %v1448
    %v1450 = vand.u32 %v394, 4294901760
    %v1451 = vsub.f32 %v394, %v1450
    %v1452 = vand.u32 %v1451, 4294901760
    %1453 = vmatpush2.msra.mxu0 %v1452
    %v1454 = vand.u32 %v393, 4294901760
    %v1455 = vsub.f32 %v393, %v1454
    %v1456 = vand.u32 %v1455, 4294901760
    %1457 = vmatprep.subr.mxu0 %v1456
    %v1458 = vand.u32 %v392, 4294901760
    %v1459 = vsub.f32 %v392, %v1458
    %v1460 = vand.u32 %v1459, 4294901760
    %1461 = vmatpush2.msra.mxu0 %v1460
    %v1462 = vand.u32 %v391, 4294901760
    %v1463 = vsub.f32 %v391, %v1462
    %v1464 = vand.u32 %v1463, 4294901760
    %1465 = vmatprep.subr.mxu0 %v1464
    %v1466 = vand.u32 %v390, 4294901760
    %v1467 = vsub.f32 %v390, %v1466
    %v1468 = vand.u32 %v1467, 4294901760
    %1469 = vmatpush2.msra.mxu0 %v1468
    %v1470 = vand.u32 %v389, 4294901760
    %v1471 = vsub.f32 %v389, %v1470
    %v1472 = vand.u32 %v1471, 4294901760
    %1473 = vmatprep.subr.mxu0 %v1472
    %v1474 = vand.u32 %v388, 4294901760
    %v1475 = vsub.f32 %v388, %v1474
    %v1476 = vand.u32 %v1475, 4294901760
    %1477 = vmatpush2.msra.mxu0 %v1476
    %v1478 = vand.u32 %v387, 4294901760
    %v1479 = vsub.f32 %v387, %v1478
    %v1480 = vand.u32 %v1479, 4294901760
    %1481 = vmatprep.subr.mxu0 %v1480
    %v1482 = vand.u32 %v386, 4294901760
    %v1483 = vsub.f32 %v386, %v1482
    %v1484 = vand.u32 %v1483, 4294901760
    %1485 = vmatpush2.msra.mxu0 %v1484
    %v1486 = vand.u32 %v385, 4294901760
    %v1487 = vsub.f32 %v385, %v1486
    %v1488 = vand.u32 %v1487, 4294901760
    %1489 = vmatprep.subr.mxu0 %v1488
    %v1490 = vand.u32 %v384, 4294901760
    %v1491 = vsub.f32 %v384, %v1490
    %v1492 = vand.u32 %v1491, 4294901760
    %1493 = vmatpush2.msra.mxu0 %v1492
    %v1494 = vand.u32 %v383, 4294901760
    %v1495 = vsub.f32 %v383, %v1494
    %v1496 = vand.u32 %v1495, 4294901760
    %1497 = vmatprep.subr.mxu0 %v1496
    %v1498 = vand.u32 %v382, 4294901760
    %v1499 = vsub.f32 %v382, %v1498
    %v1500 = vand.u32 %v1499, 4294901760
    %1501 = vmatpush2.msra.mxu0 %v1500
    %v1502 = vand.u32 %v381, 4294901760
    %v1503 = vsub.f32 %v381, %v1502
    %v1504 = vand.u32 %v1503, 4294901760
    %1505 = vmatprep.subr.mxu0 %v1504
    %v1506 = vand.u32 %v380, 4294901760
    %v1507 = vsub.f32 %v380, %v1506
    %v1508 = vand.u32 %v1507, 4294901760
    %1509 = vmatpush2.msra.mxu0 %v1508
    %v1510 = vand.u32 %v379, 4294901760
    %v1511 = vsub.f32 %v379, %v1510
    %v1512 = vand.u32 %v1511, 4294901760
    %1513 = vmatprep.subr.mxu0 %v1512
    %v1514 = vand.u32 %v378, 4294901760
    %v1515 = vsub.f32 %v378, %v1514
    %v1516 = vand.u32 %v1515, 4294901760
    %1517 = vmatpush2.msra.mxu0 %v1516
    %v1518 = vand.u32 %v377, 4294901760
    %v1519 = vsub.f32 %v377, %v1518
    %v1520 = vand.u32 %v1519, 4294901760
    %1521 = vmatprep.subr.mxu0 %v1520
    %v1522 = vand.u32 %v376, 4294901760
    %v1523 = vsub.f32 %v376, %v1522
    %v1524 = vand.u32 %v1523, 4294901760
    %1525 = vmatpush2.msra.mxu0 %v1524
    %v1526 = vand.u32 %v375, 4294901760
    %v1527 = vsub.f32 %v375, %v1526
    %v1528 = vand.u32 %v1527, 4294901760
    %1529 = vmatprep.subr.mxu0 %v1528
    %v1530 = vand.u32 %v374, 4294901760
    %v1531 = vsub.f32 %v374, %v1530
    %v1532 = vand.u32 %v1531, 4294901760
    %1533 = vmatpush2.msra.mxu0 %v1532
    %v1534 = vand.u32 %v373, 4294901760
    %v1535 = vsub.f32 %v373, %v1534
    %v1536 = vand.u32 %v1535, 4294901760
    %1537 = vmatprep.subr.mxu0 %v1536
    %v1538 = vand.u32 %v372, 4294901760
    %v1539 = vsub.f32 %v372, %v1538
    %v1540 = vand.u32 %v1539, 4294901760
    %1541 = vmatpush2.msra.mxu0 %v1540
    %v1542 = vand.u32 %v339, 4294901760
    %1543 = vmatprep.mubr.f32.mxu0 %v1542
    %v1544 = vand.u32 %v338, 4294901760
    %1545 = vmatmul.mubr.f32.gmra.mxu0 %v1544
    %v1546 = vpop.f32.mrf.mxu0
    %v1547 = vadd.f32 %v1282, %v1546
    %v1548 = vpop.f32.mrf.mxu0
    %v1549 = vadd.f32 %v1284, %v1548
    %1550 = vdwg.mxu0
    %v1551 = vand.u32 %v371, 4294901760
    %1552 = vmatprep.subr.mxu0 %v1551
    %v1553 = vand.u32 %v370, 4294901760
    %1554 = vmatpush1.msra.mxu0 %v1553
    %v1555 = vand.u32 %v369, 4294901760
    %1556 = vmatprep.subr.mxu0 %v1555
    %v1557 = vand.u32 %v368, 4294901760
    %1558 = vmatpush1.msra.mxu0 %v1557
    %v1559 = vand.u32 %v367, 4294901760
    %1560 = vmatprep.subr.mxu0 %v1559
    %v1561 = vand.u32 %v366, 4294901760
    %1562 = vmatpush1.msra.mxu0 %v1561
    %v1563 = vand.u32 %v365, 4294901760
    %1564 = vmatprep.subr.mxu0 %v1563
    %v1565 = vand.u32 %v364, 4294901760
    %1566 = vmatpush1.msra.mxu0 %v1565
    %v1567 = vand.u32 %v363, 4294901760
    %1568 = vmatprep.subr.mxu0 %v1567
    %v1569 = vand.u32 %v362, 4294901760
    %1570 = vmatpush1.msra.mxu0 %v1569
    %v1571 = vand.u32 %v361, 4294901760
    %1572 = vmatprep.subr.mxu0 %v1571
    %v1573 = vand.u32 %v360, 4294901760
    %1574 = vmatpush1.msra.mxu0 %v1573
    %v1575 = vand.u32 %v359, 4294901760
    %1576 = vmatprep.subr.mxu0 %v1575
    %v1577 = vand.u32 %v358, 4294901760
    %1578 = vmatpush1.msra.mxu0 %v1577
    %v1579 = vand.u32 %v357, 4294901760
    %1580 = vmatprep.subr.mxu0 %v1579
    %v1581 = vand.u32 %v356, 4294901760
    %1582 = vmatpush1.msra.mxu0 %v1581
    %v1583 = vand.u32 %v355, 4294901760
    %1584 = vmatprep.subr.mxu0 %v1583
    %v1585 = vand.u32 %v354, 4294901760
    %1586 = vmatpush1.msra.mxu0 %v1585
    %v1587 = vand.u32 %v353, 4294901760
    %1588 = vmatprep.subr.mxu0 %v1587
    %v1589 = vand.u32 %v352, 4294901760
    %1590 = vmatpush1.msra.mxu0 %v1589
    %v1591 = vand.u32 %v351, 4294901760
    %1592 = vmatprep.subr.mxu0 %v1591
    %v1593 = vand.u32 %v350, 4294901760
    %1594 = vmatpush1.msra.mxu0 %v1593
    %v1595 = vand.u32 %v349, 4294901760
    %1596 = vmatprep.subr.mxu0 %v1595
    %v1597 = vand.u32 %v348, 4294901760
    %1598 = vmatpush1.msra.mxu0 %v1597
    %v1599 = vand.u32 %v347, 4294901760
    %1600 = vmatprep.subr.mxu0 %v1599
    %v1601 = vand.u32 %v346, 4294901760
    %1602 = vmatpush1.msra.mxu0 %v1601
    %v1603 = vand.u32 %v345, 4294901760
    %1604 = vmatprep.subr.mxu0 %v1603
    %v1605 = vand.u32 %v344, 4294901760
    %1606 = vmatpush1.msra.mxu0 %v1605
    %v1607 = vand.u32 %v343, 4294901760
    %1608 = vmatprep.subr.mxu0 %v1607
    %v1609 = vand.u32 %v342, 4294901760
    %1610 = vmatpush1.msra.mxu0 %v1609
    %v1611 = vand.u32 %v341, 4294901760
    %1612 = vmatprep.subr.mxu0 %v1611
    %v1613 = vand.u32 %v340, 4294901760
    %1614 = vmatpush1.msra.mxu0 %v1613
    %v1615 = vand.u32 %v403, 4294901760
    %1616 = vmatprep.subr.mxu0 %v1615
    %v1617 = vand.u32 %v402, 4294901760
    %1618 = vmatpush2.msra.mxu0 %v1617
    %v1619 = vand.u32 %v401, 4294901760
    %1620 = vmatprep.subr.mxu0 %v1619
    %v1621 = vand.u32 %v400, 4294901760
    %1622 = vmatpush2.msra.mxu0 %v1621
    %v1623 = vand.u32 %v399, 4294901760
    %1624 = vmatprep.subr.mxu0 %v1623
    %v1625 = vand.u32 %v398, 4294901760
    %1626 = vmatpush2.msra.mxu0 %v1625
    %v1627 = vand.u32 %v397, 4294901760
    %1628 = vmatprep.subr.mxu0 %v1627
    %v1629 = vand.u32 %v396, 4294901760
    %1630 = vmatpush2.msra.mxu0 %v1629
    %v1631 = vand.u32 %v395, 4294901760
    %1632 = vmatprep.subr.mxu0 %v1631
    %v1633 = vand.u32 %v394, 4294901760
    %1634 = vmatpush2.msra.mxu0 %v1633
    %v1635 = vand.u32 %v393, 4294901760
    %1636 = vmatprep.subr.mxu0 %v1635
    %v1637 = vand.u32 %v392, 4294901760
    %1638 = vmatpush2.msra.mxu0 %v1637
    %v1639 = vand.u32 %v391, 4294901760
    %1640 = vmatprep.subr.mxu0 %v1639
    %v1641 = vand.u32 %v390, 4294901760
    %1642 = vmatpush2.msra.mxu0 %v1641
    %v1643 = vand.u32 %v389, 4294901760
    %1644 = vmatprep.subr.mxu0 %v1643
    %v1645 = vand.u32 %v388, 4294901760
    %1646 = vmatpush2.msra.mxu0 %v1645
    %v1647 = vand.u32 %v387, 4294901760
    %1648 = vmatprep.subr.mxu0 %v1647
    %v1649 = vand.u32 %v386, 4294901760
    %1650 = vmatpush2.msra.mxu0 %v1649
    %v1651 = vand.u32 %v385, 4294901760
    %1652 = vmatprep.subr.mxu0 %v1651
    %v1653 = vand.u32 %v384, 4294901760
    %1654 = vmatpush2.msra.mxu0 %v1653
    %v1655 = vand.u32 %v383, 4294901760
    %1656 = vmatprep.subr.mxu0 %v1655
    %v1657 = vand.u32 %v382, 4294901760
    %1658 = vmatpush2.msra.mxu0 %v1657
    %v1659 = vand.u32 %v381, 4294901760
    %1660 = vmatprep.subr.mxu0 %v1659
    %v1661 = vand.u32 %v380, 4294901760
    %1662 = vmatpush2.msra.mxu0 %v1661
    %v1663 = vand.u32 %v379, 4294901760
    %1664 = vmatprep.subr.mxu0 %v1663
    %v1665 = vand.u32 %v378, 4294901760
    %1666 = vmatpush2.msra.mxu0 %v1665
    %v1667 = vand.u32 %v377, 4294901760
    %1668 = vmatprep.subr.mxu0 %v1667
    %v1669 = vand.u32 %v376, 4294901760
    %1670 = vmatpush2.msra.mxu0 %v1669
    %v1671 = vand.u32 %v375, 4294901760
    %1672 = vmatprep.subr.mxu0 %v1671
    %v1673 = vand.u32 %v374, 4294901760
    %1674 = vmatpush2.msra.mxu0 %v1673
    %v1675 = vand.u32 %v373, 4294901760
    %1676 = vmatprep.subr.mxu0 %v1675
    %v1677 = vand.u32 %v372, 4294901760
    %1678 = vmatpush2.msra.mxu0 %v1677
    %v1679 = vand.u32 %v339, 4294901760
    %1680 = vmatprep.mubr.f32.mxu0 %v1679
    %v1681 = vand.u32 %v338, 4294901760
    %1682 = vmatmul.mubr.f32.gmra.mxu0 %v1681
    %v1683 = vpop.f32.mrf.mxu0
    %v1684 = vadd.f32 %v1547, %v1683
    %v1685 = vpop.f32.mrf.mxu0
    %v1686 = vadd.f32 %v1549, %v1685
    %1687 = vdwg.mxu0
    %1688 = vst [vmem:[#allocation8] sm:$0xff] %v1684
    %1689 = vst [vmem:[#allocation8 + $0x8] sm:$0xff] %v1686
    // Predicated region
    $region22: #{tpu_custom_call.1} parent=1 // pred_check
      _
    $region23: #{tpu_custom_call.1} parent=1 // pred_check_branch
      %1691 = sbr.rel (0) target = $region25
    $region24: #{tpu_custom_call.1} parent=1 // pred_region
      %s1693 = ssub.s32 256, 256
      %1694 = vsyncadd [#allocation5], %s1693
      %s1696 = sshll.u32 [#allocation8], 4
      %s1697 = int_to_ptr.vmem [resolvable:$true] %s1696
      %1699 = dma.vmem_to_hbm [thread:$0]  %s1697, 256, %s2, [#allocation5]
    $region25: #{tpu_custom_call.1} parent=1 // pred_fallthru
      _
    // Predicated region
    $region26: #{tpu_custom_call.1} parent=1 // pred_check
      _
    $region27: #{tpu_custom_call.1} parent=1 // pred_check_branch
      %1701 = sbr.rel (0) target = $region29
    $region28: #{tpu_custom_call.1} parent=1 // pred_region
      %1702 = dma.done [#allocation5], 256
    $region29: #{tpu_custom_call.1} parent=1 // pred_fallthru
      _
    %1703 = vsyncpa [#allocation4], 1
    %1704 = vsyncpa [#allocation7], 1
    %1705 = vsyncpa [#allocation5], 1

</llo_original>
